<compile_context>
chip_gen: v7x
topology: tpu7x:2x2x1
jax: 0.10.0
libtpu: 0.0.40
codegen_flags: <defaults>
</compile_context>

<pallas_src>
import jax
import jax.numpy as jnp
from jax.experimental import pallas as pl
from jax.experimental.pallas import tpu as pltpu


def _round_up(x, m):
    return ((x + m - 1) // m) * m


def _cdiv(a, b):
    return -(-a // b)


def _tpu_tuning():
    """Per-generation tile cap, scoped-VMEM limit, epilogue dtype, megacore hint."""
    try:
        kind = jax.devices()[0].device_kind.lower()
    except Exception:
        kind = ""
    if ("v5 lite" in kind) or ("v5e" in kind) or ("v5lite" in kind):
        # v5e: no bf16 VPU/EUP path -> keep the epilogue in f32; 1 TC/chip.
        return dict(thw_cap=1024, vmem_bytes=64 * 1024 * 1024,
                    epi_dtype=jnp.float32, two_tensorcores=False)
    if "v7" in kind:
        # v7x: only 64 MiB VMEM per TensorCore -> modest tiles & scoped limit; 2 TC/chip.
        return dict(thw_cap=1024, vmem_bytes=40 * 1024 * 1024,
                    epi_dtype=jnp.bfloat16, two_tensorcores=True)
    if "v6" in kind:
        # v6e: bf16 VPU/EUP, 128 MiB VMEM -> big tiles amortize the ~0.35us/step overhead.
        return dict(thw_cap=2048, vmem_bytes=64 * 1024 * 1024,
                    epi_dtype=jnp.bfloat16, two_tensorcores=False)
    # Unknown generation: conservative (f32 epilogue always lowers).
    return dict(thw_cap=1024, vmem_bytes=48 * 1024 * 1024,
                epi_dtype=jnp.float32, two_tensorcores=False)


# ----------------------------- Pallas kernel ------------------------------- #

def _make_fused_kernel(hw_valid, thw, need_mask, epi_dtype):
    """stem matmul+swish -> head matmul+swish -> pooled-sum (mask only on last tile) -> fc."""
    inv_hw = 1.0 / float(hw_valid)

    def swish(v):
        # x * sigmoid(x) with ONE EUP push: sigmoid(x) = 0.5 * tanh(0.5 * x) + 0.5
        half = jnp.asarray(0.5, v.dtype)
        return v * (half * jnp.tanh(half * v) + half)

    def kernel(p_ref, ws_ref, bs_ref, wh_ref, bh_ref, wf_ref, o_ref, acc_ref):
        t = pl.program_id(2)
        t_last = pl.num_programs(2) - 1

        @pl.when(t == 0)
        def _init():
            acc_ref[...] = jnp.zeros_like(acc_ref)

        # --- stem conv as im2col matmul (bf16 in, f32 acc) + folded-BN bias + swish (f32) ---
        x = p_ref[0]                                                      # (thw, Kp) bf16
        y = jnp.dot(x, ws_ref[...], preferred_element_type=jnp.float32) + bs_ref[...]
        y = swish(y)                                                      # (thw, C) f32, small

        # --- 1x1 conv-head matmul (bf16 in, f32 acc) + folded-BN bias; swish in epi_dtype ---
        f = jnp.dot(y.astype(wh_ref.dtype), wh_ref[...],
                    preferred_element_type=jnp.float32) + bh_ref[...]
        f = swish(f.astype(epi_dtype))                                    # (thw, Fb)

        def tile_partial_sum(v):                                          # (thw, Fb) -> (8, Fb) f32
            vf = v.astype(jnp.float32)
            return jnp.sum(vf.reshape(thw // 8, 8, vf.shape[-1]), axis=0)

        if need_mask:
            # Only the LAST spatial tile can contain padded rows: mask lives only there.
            @pl.when(t != t_last)
            def _accumulate():
                acc_ref[...] += tile_partial_sum(f)

            @pl.when(t == t_last)
            def _accumulate_masked():
                row = t * thw + jax.lax.broadcasted_iota(jnp.int32, (thw, 1), 0)
                fm = jnp.where(row < hw_valid, f.astype(jnp.float32), 0.0)
                acc_ref[...] += jnp.sum(fm.reshape(thw // 8, 8, fm.shape[-1]), axis=0)
        else:
            acc_ref[...] += tile_partial_sum(f)

        @pl.when(t == t_last)
        def _finalize():
            # Finish the global average pool (one 8->1 cross-sublane reduce) and apply the
            # Linear(F, 1) slice as a VPU multiply + lane reduce (no N=1 MXU matmul).
            pooled = jnp.sum(acc_ref[...], axis=0, keepdims=True) * inv_hw   # (1, Fb) f32
            logit = jnp.sum(pooled * wf_ref[...], axis=-1, keepdims=True)    # (1, 1) f32
            o_ref[0] = logit.astype(o_ref.dtype)

    return kernel


# ------------------------------- JAX glue ---------------------------------- #

def im2col(x_nhwc, kh, kw, stride, pad):
    """NHWC image -> (B, Ho*Wo, kh*kw*Cin) patch matrix (rows ordered ho, wo)."""
    x_p = jnp.pad(x_nhwc, ((0, 0), (pad, pad), (pad, pad), (0, 0)))
    B, Hp, Wp, C = x_p.shape
    Ho = (Hp - kh) // stride + 1
    Wo = (Wp - kw) // stride + 1
    cols = []
    for i in range(kh):
        for j in range(kw):
            cols.append(x_p[:, i:i + stride * Ho:stride, j:j + stride * Wo:stride, :])
    p = jnp.stack(cols, axis=3)                                           # (B, Ho, Wo, kh*kw, Cin)
    return p.reshape(B, Ho * Wo, kh * kw * C), Ho, Wo


class RSNAImgClassifierSinglePallas:
    """Deterministically initialized stand-in for RSNAImgClassifierSingle."""

    def __init__(self, key, in_ch=3, stem_ch=32, feat_dim=1280):
        k1, k2, k3, k4, k5, k6 = jax.random.split(key, 6)
        # EfficientNet-b1 stem: Conv2d(3, 32, 3, stride=2, pad=1, bias=False) + BN + swish.
        # BN (eval mode) scale folded into the conv weight; the folded bias kept explicit.
        self.w_stem = 0.1 * jax.random.normal(k1, (3, 3, in_ch, stem_ch), jnp.float32)
        self.b_stem = 0.01 * jax.random.normal(k5, (1, stem_ch), jnp.float32)
        # EfficientNet conv-head: Conv2d(-, 1280, 1, bias=False) + BN + swish -> _fc.in_features = 1280.
        self.w_head = 0.1 * jax.random.normal(k2, (stem_ch, feat_dim), jnp.float32)
        self.b_head = 0.01 * jax.random.normal(k6, (1, feat_dim), jnp.float32)
        # image_predictors = nn.Linear(1280, 1)
        bound = 1.0 / jnp.sqrt(jnp.float32(feat_dim))
        self.w_fc = jax.random.uniform(k3, (feat_dim, 1), jnp.float32, -bound, bound)
        self.b_fc = jax.random.uniform(k4, (1, 1), jnp.float32, -bound, bound)
        self.in_ch = in_ch
        self.stem_ch = stem_ch
        self.feat_dim = feat_dim
        self._tuning = _tpu_tuning()

    def __call__(self, imgs_nchw, feature_split=None):
        cfg = self._tuning

        # NCHW (PyTorch) -> NHWC, cast to bf16 BEFORE im2col so the big patch matrix is
        # built in bf16 (half the wrapper-side HBM bytes).
        x = jnp.transpose(imgs_nchw, (0, 2, 3, 1)).astype(jnp.bfloat16)
        B = x.shape[0]
        patches, Ho, Wo = im2col(x, 3, 3, stride=2, pad=1)                # (B, HW, 27) bf16
        HW = Ho * Wo
        K = patches.shape[-1]
        Kp = _round_up(K, 8)                                              # 27 -> 32 only (no 128-pad)

        # Spatial tiling: large tiles amortize per-grid-step overhead; cap per generation.
        thw = min(cfg["thw_cap"], _round_up(HW, 16))
        num_t = _cdiv(HW, thw)
        hw_pad = num_t * thw
        # Single pad pass: spatial pad and contraction pad together.
        patches = jnp.pad(patches, ((0, 0), (0, hw_pad - HW), (0, Kp - K)))

        # v7x has 2 TensorCores: if the batch axis can't feed both, split the feature dim
        # into two 640-wide halves (partial pooled sums / partial logits per half).
        if feature_split is not None:
            nsplit = int(feature_split)
        else:
            nsplit = 2 if (cfg["two_tensorcores"] and B == 1) else 1
        F = self.feat_dim
        assert F % nsplit == 0 and (F // nsplit) % 128 == 0
        Fb = F // nsplit
        C = self.stem_ch

        # bf16 matmul weights (half the resident VMEM / HBM bytes); f32 biases.
        w_stem = jnp.pad(self.w_stem.reshape(-1, C),
                         ((0, Kp - K), (0, 0))).astype(jnp.bfloat16)
        w_head = self.w_head.astype(jnp.bfloat16)
        w_fc_row = self.w_fc.reshape(1, F)                                # lane-dense f32 row

        kernel = _make_fused_kernel(HW, thw, need_mask=(hw_pad != HW),
                                    epi_dtype=cfg["epi_dtype"])

        out = pl.pallas_call(
            kernel,
            out_shape=jax.ShapeDtypeStruct((B * nsplit, 1, 1), jnp.float32),
            grid=(B, nsplit, num_t),
            in_specs=[
                pl.BlockSpec((1, thw, Kp), lambda b, s, t: (b, t, 0)),    # patch tile
                pl.BlockSpec((Kp, C), lambda b, s, t: (0, 0)),            # stem weight (resident)
                pl.BlockSpec((1, C), lambda b, s, t: (0, 0)),             # stem bias
                pl.BlockSpec((C, Fb), lambda b, s, t: (0, s)),            # head weight (half)
                pl.BlockSpec((1, Fb), lambda b, s, t: (0, s)),            # head bias (half)
                pl.BlockSpec((1, Fb), lambda b, s, t: (0, s)),            # fc weight row (half)
            ],
            out_specs=pl.BlockSpec((1, 1, 1), lambda b, s, t: (b * nsplit + s, 0, 0)),
            scratch_shapes=[pltpu.VMEM((8, Fb), jnp.float32)],            # pooled-sum accumulator
            compiler_params=pltpu.CompilerParams(
                # batch + feature-split across TCs; spatial reduction innermost, "arbitrary".
                dimension_semantics=("parallel", "parallel", "arbitrary"),
                vmem_limit_bytes=cfg["vmem_bytes"],
            ),
        )(patches, w_stem, self.b_stem, w_head, self.b_head, w_fc_row)

        # Combine feature-split partial logits and add the fc bias once (wrapper side).
        return out.reshape(B, nsplit).sum(axis=1, keepdims=True) + self.b_fc


def reference_forward(model, imgs_nchw):
    """Pure-JAX f32 reference with the same module semantics."""
    x = jnp.transpose(imgs_nchw, (0, 2, 3, 1)).astype(jnp.float32)
    patches, Ho, Wo = im2col(x, 3, 3, stride=2, pad=1)                    # (B, HW, 27)
    y = patches @ model.w_stem.reshape(-1, model.stem_ch) + model.b_stem
    y = y * jax.nn.sigmoid(y)
    f = y @ model.w_head + model.b_head
    f = f * jax.nn.sigmoid(f)
    pooled = f.mean(axis=1)                                               # (B, feat_dim)
    return pooled @ model.w_fc + model.b_fc


if __name__ == "__main__":
    key = jax.random.PRNGKey(0)
    k_model, k_data = jax.random.split(key)

    model = RSNAImgClassifierSinglePallas(k_model)

    # Small input consistent with the module's forward: NCHW RGB images.
    imgs = jax.random.normal(k_data, (2, 3, 16, 16), jnp.float32)

    preds = jax.block_until_ready(model(imgs))
    assert preds.shape == (2, 1), preds.shape

    ref = reference_forward(model, imgs)
    # bf16 matmul inputs / bf16 epilogue on v6e+ vs. f32 reference -> loosened tolerance.
    assert jnp.allclose(preds, ref, rtol=1e-2, atol=1e-2), (preds, ref)

    # Also exercise the v7x-style feature-split path (2 x 640 partial logits) with B == 1.
    preds_split = jax.block_until_ready(model(imgs[:1], feature_split=2))
    assert preds_split.shape == (1, 1), preds_split.shape
    assert jnp.allclose(preds_split, ref[:1], rtol=1e-2, atol=1e-2), (preds_split, ref[:1])

    print("KERNEL_OK")
</pallas_src>

<mosaic_0001>
module attributes {stable_mosaic.version = 11 : i64} {
  func.func @kernel(%arg0: i32, %arg1: i32, %arg2: i32, %arg3: memref<1x64x32xbf16, #tpu.memory_space<vmem>>, %arg4: memref<32x32xbf16, #tpu.memory_space<vmem>>, %arg5: memref<1x32xf32, #tpu.memory_space<vmem>>, %arg6: memref<32x1280xbf16, #tpu.memory_space<vmem>>, %arg7: memref<1x1280xf32, #tpu.memory_space<vmem>>, %arg8: memref<1x1280xf32, #tpu.memory_space<vmem>>, %arg9: memref<1x1x1xf32, #tpu.memory_space<vmem>>, %arg10: memref<8x1280xf32, #tpu.memory_space<vmem>>) attributes {dimension_semantics = [#tpu.dimension_semantics<parallel>, #tpu.dimension_semantics<parallel>, #tpu.dimension_semantics<arbitrary>], iteration_bounds = array<i64: 2, 1, 1>, scalar_prefetch = 0 : i64, scratch_operands = 1 : i64, tpu.core_type = #tpu.core_type<tc>, window_params = [{transform_indices = @transform_0, window_bounds = array<i64: 1, 64, 32>}, {pipeline_mode = #tpu.pipeline_mode<synchronous>, transform_indices = @transform_1, window_bounds = array<i64: 32, 32>}, {pipeline_mode = #tpu.pipeline_mode<synchronous>, transform_indices = @transform_2, window_bounds = array<i64: 1, 32>}, {transform_indices = @transform_3, window_bounds = array<i64: 32, 1280>}, {transform_indices = @transform_4, window_bounds = array<i64: 1, 1280>}, {transform_indices = @transform_5, window_bounds = array<i64: 1, 1280>}, {transform_indices = @transform_6, window_bounds = array<i64: 1, 1, 1>}]} {
    %c0_i32 = arith.constant 0 : i32
    %0 = arith.cmpi eq, %arg2, %c0_i32 : i32
    %1 = arith.extui %0 : i1 to i32
    %c0_i32_0 = arith.constant 0 : i32
    %2 = arith.cmpi ne, %1, %c0_i32_0 : i32
    scf.if %2 {
      %cst_25 = arith.constant 0.000000e+00 : f32
      %40 = vector.broadcast %cst_25 : f32 to vector<8x1280xf32>
      %c0_26 = arith.constant 0 : index
      %c0_27 = arith.constant 0 : index
      %41 = vector.load %arg10[%c0_26, %c0_27] : memref<8x1280xf32, #tpu.memory_space<vmem>>, vector<8x1280xf32>
      tpu.vector_store %arg10[%c0_26, %c0_27], %40 {strides = array<i32>} : memref<8x1280xf32, #tpu.memory_space<vmem>>, vector<8x1280xf32>,
    } else {
    }
    %c0 = arith.constant 0 : index
    %c0_1 = arith.constant 0 : index
    %c0_2 = arith.constant 0 : index
    %3 = vector.load %arg3[%c0, %c0_1, %c0_2] : memref<1x64x32xbf16, #tpu.memory_space<vmem>>, vector<1x64x32xbf16>
    %4 = vector.shape_cast %3 : vector<1x64x32xbf16> to vector<64x32xbf16>
    %c0_3 = arith.constant 0 : index
    %c0_4 = arith.constant 0 : index
    %5 = vector.load %arg4[%c0_3, %c0_4] : memref<32x32xbf16, #tpu.memory_space<vmem>>, vector<32x32xbf16>
    %cst = arith.constant dense<0.000000e+00> : vector<64x32xf32>
    %6 = tpu.matmul %4, %5, %cst {dimension_numbers = #tpu.dot_dimension_numbers<[1], [0], [0], [1], [0, 0, 1, 1], [], []>} : vector<64x32xbf16>, vector<32x32xbf16>, vector<64x32xf32> -> vector<64x32xf32>
    %c0_5 = arith.constant 0 : index
    %c0_6 = arith.constant 0 : index
    %7 = vector.load %arg5[%c0_5, %c0_6] : memref<1x32xf32, #tpu.memory_space<vmem>>, vector<1x32xf32>
    %8 = vector.broadcast %7 : vector<1x32xf32> to vector<64x32xf32>
    %9 = arith.addf %6, %8 : vector<64x32xf32>
    %cst_7 = arith.constant 5.000000e-01 : f32
    %10 = vector.broadcast %cst_7 : f32 to vector<64x32xf32>
    %11 = arith.mulf %10, %9 : vector<64x32xf32>
    %12 = math.tanh %11 : vector<64x32xf32>
    %cst_8 = arith.constant 5.000000e-01 : f32
    %13 = vector.broadcast %cst_8 : f32 to vector<64x32xf32>
    %14 = arith.mulf %13, %12 : vector<64x32xf32>
    %cst_9 = arith.constant 5.000000e-01 : f32
    %15 = vector.broadcast %cst_9 : f32 to vector<64x32xf32>
    %16 = arith.addf %14, %15 : vector<64x32xf32>
    %17 = arith.mulf %9, %16 : vector<64x32xf32>
    %18 = arith.truncf %17 : vector<64x32xf32> to vector<64x32xbf16>
    %c0_10 = arith.constant 0 : index
    %c0_11 = arith.constant 0 : index
    %19 = vector.load %arg6[%c0_10, %c0_11] : memref<32x1280xbf16, #tpu.memory_space<vmem>>, vector<32x1280xbf16>
    %cst_12 = arith.constant dense<0.000000e+00> : vector<64x1280xf32>
    %20 = tpu.matmul %18, %19, %cst_12 {dimension_numbers = #tpu.dot_dimension_numbers<[1], [0], [0], [1], [0, 0, 1, 1], [], []>} : vector<64x32xbf16>, vector<32x1280xbf16>, vector<64x1280xf32> -> vector<64x1280xf32>
    %c0_13 = arith.constant 0 : index
    %c0_14 = arith.constant 0 : index
    %21 = vector.load %arg7[%c0_13, %c0_14] : memref<1x1280xf32, #tpu.memory_space<vmem>>, vector<1x1280xf32>
    %22 = vector.broadcast %21 : vector<1x1280xf32> to vector<64x1280xf32>
    %23 = arith.addf %20, %22 : vector<64x1280xf32>
    %cst_15 = arith.constant 5.000000e-01 : f32
    %24 = vector.broadcast %cst_15 : f32 to vector<64x1280xf32>
    %25 = arith.mulf %24, %23 : vector<64x1280xf32>
    %26 = math.tanh %25 : vector<64x1280xf32>
    %cst_16 = arith.constant 5.000000e-01 : f32
    %27 = vector.broadcast %cst_16 : f32 to vector<64x1280xf32>
    %28 = arith.mulf %27, %26 : vector<64x1280xf32>
    %cst_17 = arith.constant 5.000000e-01 : f32
    %29 = vector.broadcast %cst_17 : f32 to vector<64x1280xf32>
    %30 = arith.addf %28, %29 : vector<64x1280xf32>
    %31 = arith.mulf %23, %30 : vector<64x1280xf32>
    %c0_18 = arith.constant 0 : index
    %c0_19 = arith.constant 0 : index
    %32 = vector.load %arg10[%c0_18, %c0_19] : memref<8x1280xf32, #tpu.memory_space<vmem>>, vector<8x1280xf32>
    %33 = vector.shape_cast %31 : vector<64x1280xf32> to vector<8x8x1280xf32>
    %cst_20 = arith.constant dense<0.000000e+00> : vector<8x1280xf32>
    %34 = vector.multi_reduction <add>, %33, %cst_20 [0] : vector<8x8x1280xf32> to vector<8x1280xf32>
    %35 = arith.addf %32, %34 : vector<8x1280xf32>
    %c0_21 = arith.constant 0 : index
    %c0_22 = arith.constant 0 : index
    %36 = vector.load %arg10[%c0_21, %c0_22] : memref<8x1280xf32, #tpu.memory_space<vmem>>, vector<8x1280xf32>
    tpu.vector_store %arg10[%c0_21, %c0_22], %35 {strides = array<i32>} : memref<8x1280xf32, #tpu.memory_space<vmem>>, vector<8x1280xf32>,
    %c0_i32_23 = arith.constant 0 : i32
    %37 = arith.cmpi eq, %arg2, %c0_i32_23 : i32
    %38 = arith.extui %37 : i1 to i32
    %c0_i32_24 = arith.constant 0 : i32
    %39 = arith.cmpi ne, %38, %c0_i32_24 : i32
    scf.if %39 {
      %c0_25 = arith.constant 0 : index
      %c0_26 = arith.constant 0 : index
      %40 = vector.load %arg10[%c0_25, %c0_26] : memref<8x1280xf32, #tpu.memory_space<vmem>>, vector<8x1280xf32>
      %cst_27 = arith.constant dense<0.000000e+00> : vector<1280xf32>
      %41 = vector.multi_reduction <add>, %40, %cst_27 [0] : vector<8x1280xf32> to vector<1280xf32>
      %42 = vector.shape_cast %41 : vector<1280xf32> to vector<1x1280xf32>
      %cst_28 = arith.constant 1.562500e-02 : f32
      %43 = vector.broadcast %cst_28 : f32 to vector<1x1280xf32>
      %44 = arith.mulf %42, %43 : vector<1x1280xf32>
      %c0_29 = arith.constant 0 : index
      %c0_30 = arith.constant 0 : index
      %45 = vector.load %arg8[%c0_29, %c0_30] : memref<1x1280xf32, #tpu.memory_space<vmem>>, vector<1x1280xf32>
      %46 = arith.mulf %44, %45 : vector<1x1280xf32>
      %cst_31 = arith.constant dense<0.000000e+00> : vector<1xf32>
      %47 = vector.multi_reduction <add>, %46, %cst_31 [1] : vector<1x1280xf32> to vector<1xf32>
      %48 = vector.shape_cast %47 : vector<1xf32> to vector<1x1xf32>
      %c0_32 = arith.constant 0 : index
      %c0_33 = arith.constant 0 : index
      %c0_34 = arith.constant 0 : index
      %49 = vector.load %arg9[%c0_32, %c0_33, %c0_34] : memref<1x1x1xf32, #tpu.memory_space<vmem>>, vector<1x1x1xf32>
      %50 = vector.shape_cast %49 : vector<1x1x1xf32> to vector<1x1xf32>
      %51 = vector.shape_cast %48 : vector<1x1xf32> to vector<1x1x1xf32>
      tpu.vector_store %arg9[%c0_32, %c0_33, %c0_34], %51 {strides = array<i32>} : memref<1x1x1xf32, #tpu.memory_space<vmem>>, vector<1x1x1xf32>,
    } else {
    }
    return
  }
  func.func @transform_0(%arg0: i32, %arg1: i32, %arg2: i32) -> (i32, i32, i32) {
    %c0_i32 = arith.constant 0 : i32
    %c0_i32_0 = arith.constant 0 : i32
    return %arg0, %arg2, %c0_i32 : i32, i32, i32
  }
  func.func @transform_1(%arg0: i32, %arg1: i32, %arg2: i32) -> (i32, i32) {
    %c0_i32 = arith.constant 0 : i32
    %c0_i32_0 = arith.constant 0 : i32
    %c0_i32_1 = arith.constant 0 : i32
    return %c0_i32, %c0_i32_0 : i32, i32
  }
  func.func @transform_2(%arg0: i32, %arg1: i32, %arg2: i32) -> (i32, i32) {
    %c0_i32 = arith.constant 0 : i32
    %c0_i32_0 = arith.constant 0 : i32
    %c0_i32_1 = arith.constant 0 : i32
    return %c0_i32, %c0_i32_0 : i32, i32
  }
  func.func @transform_3(%arg0: i32, %arg1: i32, %arg2: i32) -> (i32, i32) {
    %c0_i32 = arith.constant 0 : i32
    %c0_i32_0 = arith.constant 0 : i32
    return %c0_i32, %arg1 : i32, i32
  }
  func.func @transform_4(%arg0: i32, %arg1: i32, %arg2: i32) -> (i32, i32) {
    %c0_i32 = arith.constant 0 : i32
    %c0_i32_0 = arith.constant 0 : i32
    return %c0_i32, %arg1 : i32, i32
  }
  func.func @transform_5(%arg0: i32, %arg1: i32, %arg2: i32) -> (i32, i32) {
    %c0_i32 = arith.constant 0 : i32
    %c0_i32_0 = arith.constant 0 : i32
    return %c0_i32, %arg1 : i32, i32
  }
  func.func @transform_6(%arg0: i32, %arg1: i32, %arg2: i32) -> (i32, i32, i32) {
    %c1_i32 = arith.constant 1 : i32
    %0 = arith.muli %arg0, %c1_i32 : i32
    %1 = arith.addi %0, %arg1 : i32
    %c0_i32 = arith.constant 0 : i32
    %c0_i32_0 = arith.constant 0 : i32
    %c0_i32_1 = arith.constant 0 : i32
    return %1, %c0_i32, %c0_i32_0 : i32, i32, i32
  }
}

</mosaic_0001>

<llo_original>
// kernel: tpu_custom_call.1
$region0: #{tpu_custom_call.1}
  #allocation0 [shape = 'u32[]', space=smem, size = 0x4, offset = 0x4, fixed_abs, tag = 'smem constant byte address 0x4 - core index']
  #allocation1 [shape = 'u32[144,128]{1,0:T(1,128)}', space=vmem, size = 0x12000, scoped, tag = 'internal scratch']
  #allocation2 [shape = 'f32[8,1280]{1,0:T(8,128)}', space=vmem, size = 0xa000, scoped, tag = 'scratch operand']
  %s0 = inlined_call_operand.vmem [shape: bf16[2,64,32], index: 0, kind: input, shape index: {}]
  %s1 = inlined_call_operand.vmem [shape: bf16[32,32], index: 1, kind: input, shape index: {}]
  %s2 = inlined_call_operand.vmem [shape: f32[1,32], index: 2, kind: input, shape index: {}]
  %s3 = inlined_call_operand.hbm [shape: bf16[32,1280], index: 3, kind: input, shape index: {}]
  %s4 = inlined_call_operand.vmem [shape: f32[1,1280], index: 4, kind: input, shape index: {}]
  %s5 = inlined_call_operand.vmem [shape: f32[1,1280], index: 5, kind: input, shape index: {}]
  %s6 = inlined_call_operand.vmem [shape: f32[2,1,1], index: 6, kind: output, shape index: {}]
  %s7 = sld [smem:[#allocation0]]
  $region69: #{tpu_custom_call.1} parent=0
    _
  %s9 = ssub.s32 1, %s7
  %s10 = scalar_select 0, %s9, %s7
  $region1: #{tpu_custom_call.1} parent=0
    #allocation3 [shape = 'u8[81920]{0}', space=vmem, size = 0x14000, scoped, tag = 'input window, operand 3, single buffered']
    #allocation4 [shape = 's32[2]{0}', space=sflag, size = 0x8, scoped, tag = 'scoped memory for tpu_custom_call.1']
    %11 = vsyncpa [#allocation4], 0
    loop: start=0, step=1, limit=4
    $region2: #{tpu_custom_call.1} parent=1 // loop_pre_header
      _
    $region3: #{tpu_custom_call.1} parent=1 // loop_header
      %s13 = sphi 0, %s17
      %p14 = scmp.ge.s32.totalorder %s13, 4
      %s20 = sphi 0, %s39
      %s21 = sphi 0, %s35
      %s22 = sphi 0, %s31
      %s23 = sphi 0, %s20
      %s24 = sphi 0, %s21
      %s25 = sphi 0, %s22
      %s26 = sphi 0, %s23
      %s27 = sphi 0, %s24
      %s28 = sphi 0, %s25
      %s44 = sphi 0, %s46
      %s47 = sphi 0, %s44
      %s48 = sphi 0, %s47
      %s64 = sphi 0, %s48
      %s68 = sphi 0, %s68
      %s70 = sphi 0, %s68
      %s71 = sphi 0, %s70
      %s85 = sphi 0, %s71
      %s89 = sphi 0, %s89
      %s91 = sphi 0, %s89
      %s92 = sphi 0, %s91
      %s106 = sphi 0, %s92
      %s112 = sphi 0, %s114
      %s115 = sphi 0, %s112
      %s116 = sphi 0, %s115
      %s132 = sphi 0, %s116
      %s138 = sphi 0, %s140
      %s141 = sphi 0, %s138
      %s142 = sphi 0, %s141
      %s158 = sphi 0, %s142
      %s164 = sphi 0, %s166
      %s167 = sphi 0, %s164
      %s168 = sphi 0, %s167
      %s184 = sphi 0, %s168
      %s192 = sphi 0, %s194
      %s195 = sphi 0, %s192
      %s196 = sphi 0, %s195
      %s212 = sphi 0, %s196
    $region4: #{tpu_custom_call.1} parent=1 // loop_header_branch
      %16 = sbr.rel (%p14) target = $region8
    $region5: #{tpu_custom_call.1} parent=1 // loop_body
      %s18 = ssub.s32 %s13, 1
      %s19 = ssub.s32 %s13, 2
      %s29 = sadd.s32 1, %s22
      %p30 = scmp.ge.s32.totalorder %s29, 1
      %s31 = scalar_select %p30, 0, %s29
      %s32 = sadd.s32 1, %s21
      %s33 = scalar_select %p30, %s32, %s21
      %p34 = scmp.ge.s32.totalorder %s33, 1
      %s35 = scalar_select %p34, 0, %s33
      %s36 = sadd.s32 1, %s20
      %s37 = scalar_select %p34, %s36, %s20
      %p38 = scmp.ge.s32.totalorder %s37, 2
      %s39 = scalar_select %p38, 0, %s37
      %s40 = ssub.s32 %s20, %s39
      %s41 = ssub.s32 %s22, %s31
      %s42 = sor.u32 %s40, %s41
      %p43 = scmp.eq.s32.totalorder %s42, 0
      %s45 = sadd.s32 %s44, 1
      %s46 = scalar_select %p43, %s44, %s45
      %p49 = pneg %p43
      %p50 = scmp.eq.s32.totalorder %s13, 1
      %p51 = por %p49, %p50
      %p52 = scmp.ne.s32.totalorder %s44, %s47
      %p53 = scmp.eq.s32.totalorder %s13, 0
      %p54 = por %p52, %p53
      %p55 = scmp.ne.s32.totalorder %s44, %s47
      %p56 = scmp.eq.s32.totalorder %s18, 1
      %p57 = por %p55, %p56
      %p58 = scmp.ne.s32.totalorder %s47, %s48
      %p59 = scmp.eq.s32.totalorder %s18, 0
      %p60 = por %p58, %p59
      %p61 = scmp.ne.s32.totalorder %s47, %s48
      %p62 = scmp.eq.s32.totalorder %s19, 1
      %p63 = por %p61, %p62
      %p65 = scmp.ne.s32.totalorder %s48, %s64
      %p66 = scmp.eq.s32.totalorder %s19, 0
      %p67 = por %p65, %p66
      %s69 = sadd.s32 %s68, 1
      %p72 = scmp.eq.s32.totalorder %s13, 1
      %p73 = scmp.ne.s32.totalorder %s68, %s70
      %p74 = scmp.eq.s32.totalorder %s13, 0
      %p75 = por %p73, %p74
      %p76 = scmp.ne.s32.totalorder %s68, %s70
      %p77 = scmp.eq.s32.totalorder %s18, 1
      %p78 = por %p76, %p77
      %p79 = scmp.ne.s32.totalorder %s70, %s71
      %p80 = scmp.eq.s32.totalorder %s18, 0
      %p81 = por %p79, %p80
      %p82 = scmp.ne.s32.totalorder %s70, %s71
      %p83 = scmp.eq.s32.totalorder %s19, 1
      %p84 = por %p82, %p83
      %p86 = scmp.ne.s32.totalorder %s71, %s85
      %p87 = scmp.eq.s32.totalorder %s19, 0
      %p88 = por %p86, %p87
      %s90 = sadd.s32 %s89, 1
      %p93 = scmp.eq.s32.totalorder %s13, 1
      %p94 = scmp.ne.s32.totalorder %s89, %s91
      %p95 = scmp.eq.s32.totalorder %s13, 0
      %p96 = por %p94, %p95
      %p97 = scmp.ne.s32.totalorder %s89, %s91
      %p98 = scmp.eq.s32.totalorder %s18, 1
      %p99 = por %p97, %p98
      %p100 = scmp.ne.s32.totalorder %s91, %s92
      %p101 = scmp.eq.s32.totalorder %s18, 0
      %p102 = por %p100, %p101
      %p103 = scmp.ne.s32.totalorder %s91, %s92
      %p104 = scmp.eq.s32.totalorder %s19, 1
      %p105 = por %p103, %p104
      %p107 = scmp.ne.s32.totalorder %s92, %s106
      %p108 = scmp.eq.s32.totalorder %s19, 0
      %p109 = por %p107, %p108
      %s110 = ssub.s32 %s21, %s35
      %p111 = scmp.eq.s32.totalorder %s110, 0
      %s113 = sadd.s32 %s112, 1
      %s114 = scalar_select %p111, %s112, %s113
      %p117 = pneg %p111
      %p118 = scmp.eq.s32.totalorder %s13, 1
      %p119 = por %p117, %p118
      %p120 = scmp.ne.s32.totalorder %s112, %s115
      %p121 = scmp.eq.s32.totalorder %s13, 0
      %p122 = por %p120, %p121
      %p123 = scmp.ne.s32.totalorder %s112, %s115
      %p124 = scmp.eq.s32.totalorder %s18, 1
      %p125 = por %p123, %p124
      %p126 = scmp.ne.s32.totalorder %s115, %s116
      %p127 = scmp.eq.s32.totalorder %s18, 0
      %p128 = por %p126, %p127
      %p129 = scmp.ne.s32.totalorder %s115, %s116
      %p130 = scmp.eq.s32.totalorder %s19, 1
      %p131 = por %p129, %p130
      %p133 = scmp.ne.s32.totalorder %s116, %s132
      %p134 = scmp.eq.s32.totalorder %s19, 0
      %p135 = por %p133, %p134
      %s136 = ssub.s32 %s21, %s35
      %p137 = scmp.eq.s32.totalorder %s136, 0
      %s139 = sadd.s32 %s138, 1
      %s140 = scalar_select %p137, %s138, %s139
      %p143 = pneg %p137
      %p144 = scmp.eq.s32.totalorder %s13, 1
      %p145 = por %p143, %p144
      %p146 = scmp.ne.s32.totalorder %s138, %s141
      %p147 = scmp.eq.s32.totalorder %s13, 0
      %p148 = por %p146, %p147
      %p149 = scmp.ne.s32.totalorder %s138, %s141
      %p150 = scmp.eq.s32.totalorder %s18, 1
      %p151 = por %p149, %p150
      %p152 = scmp.ne.s32.totalorder %s141, %s142
      %p153 = scmp.eq.s32.totalorder %s18, 0
      %p154 = por %p152, %p153
      %p155 = scmp.ne.s32.totalorder %s141, %s142
      %p156 = scmp.eq.s32.totalorder %s19, 1
      %p157 = por %p155, %p156
      %p159 = scmp.ne.s32.totalorder %s142, %s158
      %p160 = scmp.eq.s32.totalorder %s19, 0
      %p161 = por %p159, %p160
      %s162 = ssub.s32 %s21, %s35
      %p163 = scmp.eq.s32.totalorder %s162, 0
      %s165 = sadd.s32 %s164, 1
      %s166 = scalar_select %p163, %s164, %s165
      %p169 = pneg %p163
      %p170 = scmp.eq.s32.totalorder %s13, 1
      %p171 = por %p169, %p170
      %p172 = scmp.ne.s32.totalorder %s164, %s167
      %p173 = scmp.eq.s32.totalorder %s13, 0
      %p174 = por %p172, %p173
      %p175 = scmp.ne.s32.totalorder %s164, %s167
      %p176 = scmp.eq.s32.totalorder %s18, 1
      %p177 = por %p175, %p176
      %p178 = scmp.ne.s32.totalorder %s167, %s168
      %p179 = scmp.eq.s32.totalorder %s18, 0
      %p180 = por %p178, %p179
      %p181 = scmp.ne.s32.totalorder %s167, %s168
      %p182 = scmp.eq.s32.totalorder %s19, 1
      %p183 = por %p181, %p182
      %p185 = scmp.ne.s32.totalorder %s168, %s184
      %p186 = scmp.eq.s32.totalorder %s19, 0
      %p187 = por %p185, %p186
      %s188 = sadd.s32 %s20, %s21
      %s189 = sadd.s32 %s39, %s35
      %s190 = ssub.s32 %s188, %s189
      %p191 = scmp.eq.s32.totalorder %s190, 0
      %s193 = sadd.s32 %s192, 1
      %s194 = scalar_select %p191, %s192, %s193
      %p197 = pneg %p191
      %p198 = scmp.eq.s32.totalorder %s13, 1
      %p199 = por %p197, %p198
      %p200 = scmp.ne.s32.totalorder %s192, %s195
      %p201 = scmp.eq.s32.totalorder %s13, 0
      %p202 = por %p200, %p201
      %p203 = scmp.ne.s32.totalorder %s192, %s195
      %p204 = scmp.eq.s32.totalorder %s18, 1
      %p205 = por %p203, %p204
      %p206 = scmp.ne.s32.totalorder %s195, %s196
      %p207 = scmp.eq.s32.totalorder %s18, 0
      %p208 = por %p206, %p207
      %p209 = scmp.ne.s32.totalorder %s195, %s196
      %p210 = scmp.eq.s32.totalorder %s19, 1
      %p211 = por %p209, %p210
      %p213 = scmp.ne.s32.totalorder %s196, %s212
      %p214 = scmp.eq.s32.totalorder %s19, 0
      %p215 = por %p213, %p214
      %p216 = scmp.le.s32.totalorder 1, %s13
      %p217 = scmp.lt.s32.totalorder %s13, 3
      %p218 = pnand %p216, %p217
      %p219 = pneg %p218
      // Predicated region
      $region9: #{tpu_custom_call.1} parent=5 // pred_check
        _
      $region10: #{tpu_custom_call.1} parent=5 // pred_check_branch
        %221 = sbr.rel (%p218) target = $region12
      $region11: #{tpu_custom_call.1} parent=5 // pred_region
        %s222 = ssub.s32 %s13, 1
        // Predicated region
        $region13: #{tpu_custom_call.1} parent=11 // pred_check
          %p223 = pneg %p81
        $region14: #{tpu_custom_call.1} parent=11 // pred_check_branch
          %225 = sbr.rel (%p223) target = $region16
        $region15: #{tpu_custom_call.1} parent=11 // pred_region
          _
        $region16: #{tpu_custom_call.1} parent=11 // pred_fallthru
          _
        // Predicated region
        $region17: #{tpu_custom_call.1} parent=11 // pred_check
          %p226 = pneg %p102
        $region18: #{tpu_custom_call.1} parent=11 // pred_check_branch
          %228 = sbr.rel (%p226) target = $region20
        $region19: #{tpu_custom_call.1} parent=11 // pred_region
          _
        $region20: #{tpu_custom_call.1} parent=11 // pred_fallthru
          _
        // Predicated region
        $region21: #{tpu_custom_call.1} parent=11 // pred_check
          %p229 = pneg %p128
        $region22: #{tpu_custom_call.1} parent=11 // pred_check_branch
          %231 = sbr.rel (%p229) target = $region24
        $region23: #{tpu_custom_call.1} parent=11 // pred_region
          %s232 = smul.u32 10, %s24
          %s234 = ssub.s32 2560, 2560
          %235 = vsyncadd [#allocation4], %s234
          %s236 = smul.addr %s232, 64
          %s237 = scalar_lea.hbm %s3, %s236
          %s238 = sshll.u32 [#allocation3], 4
          %s239 = int_to_ptr.vmem [resolvable:$true] %s238
          %244 = dma.hbm_to_vmem [thread:$0]  %s237, 2560, %s239, [#allocation4], 640, 640, 40
        $region24: #{tpu_custom_call.1} parent=11 // pred_fallthru
          _
        // Predicated region
        $region25: #{tpu_custom_call.1} parent=11 // pred_check
          %p245 = pneg %p154
        $region26: #{tpu_custom_call.1} parent=11 // pred_check_branch
          %247 = sbr.rel (%p245) target = $region28
        $region27: #{tpu_custom_call.1} parent=11 // pred_region
          %s248 = smul.u32 10, %s24
          %p249 = scmp.lt.s32.totalorder %s248, 9
          %s250 = scalar_select %p249, %s248, 9
          %s251 = scalar_lea.vmem %s4, %s250
          %s252 = smul.u32 10, %s24
        $region28: #{tpu_custom_call.1} parent=11 // pred_fallthru
          _
        // Predicated region
        $region29: #{tpu_custom_call.1} parent=11 // pred_check
          %p253 = pneg %p180
        $region30: #{tpu_custom_call.1} parent=11 // pred_check_branch
          %255 = sbr.rel (%p253) target = $region32
        $region31: #{tpu_custom_call.1} parent=11 // pred_region
          %s256 = smul.u32 10, %s24
          %p257 = scmp.lt.s32.totalorder %s256, 9
          %s258 = scalar_select %p257, %s256, 9
          %s259 = scalar_lea.vmem %s5, %s258
          %s260 = smul.u32 10, %s24
        $region32: #{tpu_custom_call.1} parent=11 // pred_fallthru
          _
      $region12: #{tpu_custom_call.1} parent=5 // pred_fallthru
        _
      %p261 = scmp.lt.s32.totalorder %s13, 2
      // Predicated region
      $region33: #{tpu_custom_call.1} parent=5 // pred_check
        %p262 = pneg %p261
      $region34: #{tpu_custom_call.1} parent=5 // pred_check_branch
        %264 = sbr.rel (%p262) target = $region36
      $region35: #{tpu_custom_call.1} parent=5 // pred_region
        // Predicated region
        $region37: #{tpu_custom_call.1} parent=35 // pred_check
          %p265 = pneg %p54
        $region38: #{tpu_custom_call.1} parent=35 // pred_check_branch
          %267 = sbr.rel (%p265) target = $region40
        $region39: #{tpu_custom_call.1} parent=35 // pred_region
          %s268 = smul.u32 8, %s22
          %p269 = scmp.lt.s32.totalorder %s20, 1
          %s270 = scalar_select %p269, %s20, 1
          %p271 = scmp.lt.s32.totalorder %s268, 7
          %s272 = scalar_select %p271, %s268, 7
          %s273 = smul.addr %s270, 8
          %s274 = sadd.s32 %s272, %s273
          %s275 = smul.addr %s274, 4
          %s276 = scalar_lea.vmem %s0, %s275
          %s277 = smul.u32 8, %s22
        $region40: #{tpu_custom_call.1} parent=35 // pred_fallthru
          _
      $region36: #{tpu_custom_call.1} parent=5 // pred_fallthru
        _
      %p278 = scmp.le.s32.totalorder 1, %s13
      %p279 = scmp.lt.s32.totalorder %s13, 3
      %p280 = pnand %p278, %p279
      %p281 = pneg %p280
      // Predicated region
      $region41: #{tpu_custom_call.1} parent=5 // pred_check
        _
      $region42: #{tpu_custom_call.1} parent=5 // pred_check_branch
        %283 = sbr.rel (%p280) target = $region44
      $region43: #{tpu_custom_call.1} parent=5 // pred_region
        %s284 = ssub.s32 %s13, 1
        // Predicated region
        $region45: #{tpu_custom_call.1} parent=43 // pred_check
          %p285 = pneg %p128
        $region46: #{tpu_custom_call.1} parent=43 // pred_check_branch
          %287 = sbr.rel (%p285) target = $region48
        $region47: #{tpu_custom_call.1} parent=43 // pred_region
          %288 = dma.done [#allocation4], 2560
        $region48: #{tpu_custom_call.1} parent=43 // pred_fallthru
          _
        %s289 = smul.u32 8, %s25
        %p290 = scmp.lt.s32.totalorder %s23, 1
        %s291 = scalar_select %p290, %s23, 1
        %p292 = scmp.lt.s32.totalorder %s289, 7
        %s293 = scalar_select %p292, %s289, 7
        %s294 = smul.addr %s291, 8
        %s295 = sadd.s32 %s293, %s294
        %s296 = smul.addr %s295, 4
        %s297 = scalar_lea.vmem %s0, %s296
        %p298 = pneg %p60
        %p299 = pneg %p57
        %p300 = pneg %p81
        %p301 = pneg %p78
        %p302 = pneg %p102
        %p303 = pneg %p99
        %p304 = pneg %p128
        %p305 = pneg %p125
        %s306 = smul.u32 10, %s24
        %p307 = scmp.lt.s32.totalorder %s306, 9
        %s308 = scalar_select %p307, %s306, 9
        %s309 = scalar_lea.vmem %s4, %s308
        %p310 = pneg %p154
        %p311 = pneg %p151
        %s312 = smul.u32 10, %s24
        %p313 = scmp.lt.s32.totalorder %s312, 9
        %s314 = scalar_select %p313, %s312, 9
        %s315 = scalar_lea.vmem %s5, %s314
        %p316 = pneg %p180
        %p317 = pneg %p177
        %p318 = pneg %p208
        %p319 = pneg %p205
        %s320 = sadd.s32 %s23, %s24
        %p321 = scmp.lt.s32.totalorder %s320, 1
        %s322 = scalar_select %p321, %s320, 1
        %s323 = scalar_lea.vmem %s6, %s322
        %s324 = smul.u32 8, %s25
        %p325 = scmp.lt.s32.totalorder %s23, 1
        %s326 = scalar_select %p325, %s23, 1
        %p327 = scmp.lt.s32.totalorder %s324, 7
        %s328 = scalar_select %p327, %s324, 7
        %s329 = smul.addr %s326, 8
        %s330 = sadd.s32 %s328, %s329
        %s331 = smul.addr %s330, 4
        %s332 = scalar_lea.vmem %s0, %s331
        %s333 = smul.u32 8, %s25
        %s334 = smul.u32 10, %s24
        %s335 = smul.u32 10, %s24
        %p336 = scmp.lt.s32.totalorder %s335, 9
        %s337 = scalar_select %p336, %s335, 9
        %s338 = scalar_lea.vmem %s4, %s337
        %s339 = smul.u32 10, %s24
        %s340 = smul.u32 10, %s24
        %p341 = scmp.lt.s32.totalorder %s340, 9
        %s342 = scalar_select %p341, %s340, 9
        %s343 = scalar_lea.vmem %s5, %s342
        %s344 = smul.u32 10, %s24
        %s345 = sadd.s32 %s23, %s24
        %p346 = scmp.lt.s32.totalorder %s345, 1
        %s347 = scalar_select %p346, %s345, 1
        %s348 = scalar_lea.vmem %s6, %s347
        %s349 = sadd.s32 %s23, %s24
        %p351 = scmp.eq.s32.totalorder %s25, 0
        // Predicated region
        $region49: #{tpu_custom_call.1} parent=43 // pred_check
          %p352 = pneg %p351
        $region50: #{tpu_custom_call.1} parent=43 // pred_check_branch
          %354 = sbr.rel (%p352) target = $region52
        $region51: #{tpu_custom_call.1} parent=43 // pred_region
          %355 = vst [vmem:[#allocation2] sm:$0xff] 0.0
          %356 = vst [vmem:[#allocation2 + $0x8] sm:$0xff] 0.0
          %357 = vst [vmem:[#allocation2 + $0x10] sm:$0xff] 0.0
          %358 = vst [vmem:[#allocation2 + $0x18] sm:$0xff] 0.0
          %359 = vst [vmem:[#allocation2 + $0x20] sm:$0xff] 0.0
          %360 = vst [vmem:[#allocation2 + $0x28] sm:$0xff] 0.0
          %361 = vst [vmem:[#allocation2 + $0x30] sm:$0xff] 0.0
          %362 = vst [vmem:[#allocation2 + $0x38] sm:$0xff] 0.0
          %363 = vst [vmem:[#allocation2 + $0x40] sm:$0xff] 0.0
          %364 = vst [vmem:[#allocation2 + $0x48] sm:$0xff] 0.0
        $region52: #{tpu_custom_call.1} parent=43 // pred_fallthru
          _
        %v365 = vld [vmem:[%s332] sm:$0xf]
        %v366 = vld [vmem:[%s332 + $0x4] sm:$0xf]
        %v367 = vld [vmem:[%s332 + $0x8] sm:$0xf]
        %v368 = vld [vmem:[%s332 + $0xc] sm:$0xf]
        %v369 = vld [vmem:[%s332 + $0x10] sm:$0xf]
        %v370 = vld [vmem:[%s332 + $0x14] sm:$0xf]
        %v371 = vld [vmem:[%s332 + $0x18] sm:$0xf]
        %v372 = vld [vmem:[%s332 + $0x1c] sm:$0xf]
        %v373 = vld [vmem:[%s1] sm:$0xf]
        %v374 = vld [vmem:[%s1 + $0x4] sm:$0xf]
        %v375 = vld [vmem:[%s1 + $0x8] sm:$0xf]
        %v376 = vld [vmem:[%s1 + $0xc] sm:$0xf]
        %v377 = vld [vmem:[%s2] sm:$0x1]
        %v379 = vlaneseq
        %v380 = vshrl.u32 %v379, 7
        %v381 = vsub.s32 0, %v380
        %v382 = vrot.slane %v377, %v381
        %v392 = vunpack.c.l.b16 %v365
        %v393 = vunpack.c.l.b16 %v366
        %v394 = vunpack.c.l.b16 %v367
        %v395 = vunpack.c.l.b16 %v368
        %v396 = vunpack.c.l.b16 %v369
        %v397 = vunpack.c.l.b16 %v370
        %v398 = vunpack.c.l.b16 %v371
        %v399 = vunpack.c.l.b16 %v372
        %v400 = vpack.c.b16 %v393, %v392
        %v401 = vpack.c.b16 %v395, %v394
        %v402 = vpack.c.b16 %v397, %v396
        %v403 = vpack.c.b16 %v399, %v398
        %v408 = vunpack.c.l.b16 %v373
        %v409 = vunpack.c.l.b16 %v374
        %v410 = vunpack.c.l.b16 %v375
        %v411 = vunpack.c.l.b16 %v376
        %v412 = vpack.c.b16 %v409, %v408
        %v413 = vpack.c.b16 %v411, %v410
        %vm416 = vcmask 261120
        %v418 = vsel %vm416, %v400, 0
        %v421 = vsel %vm416, %v401, 0
        %v424 = vsel %vm416, %v402, 0
        %v427 = vsel %vm416, %v403, 0
        %429 = vmatprep.subr.bf16.mxu0 0
        %430 = vmatpush1.bf16.msra.mxu0 %v412
        %431 = vmatprep.subr.bf16.mxu0 0
        %432 = vmatpush1.bf16.msra.mxu0 %v413
        %433 = vmatprep.subr.bf16.mxu0 0
        %434 = vmatpush1.bf16.msra.mxu0 0
        %435 = vmatprep.subr.bf16.mxu0 0
        %436 = vmatpush1.bf16.msra.mxu0 0
        %437 = vmatprep.subr.bf16.mxu0 0
        %438 = vmatpush1.bf16.msra.mxu0 0
        %439 = vmatprep.subr.bf16.mxu0 0
        %440 = vmatpush1.bf16.msra.mxu0 0
        %441 = vmatprep.subr.bf16.mxu0 0
        %442 = vmatpush1.bf16.msra.mxu0 0
        %443 = vmatprep.subr.bf16.mxu0 0
        %444 = vmatpush1.bf16.msra.mxu0 0
        %445 = vmatprep.subr.bf16.mxu0 0
        %446 = vmatpush1.bf16.msra.mxu0 0
        %447 = vmatprep.subr.bf16.mxu0 0
        %448 = vmatpush1.bf16.msra.mxu0 0
        %449 = vmatprep.subr.bf16.mxu0 0
        %450 = vmatpush1.bf16.msra.mxu0 0
        %451 = vmatprep.subr.bf16.mxu0 0
        %452 = vmatpush1.bf16.msra.mxu0 0
        %453 = vmatprep.subr.bf16.mxu0 0
        %454 = vmatpush1.bf16.msra.mxu0 0
        %455 = vmatprep.subr.bf16.mxu0 0
        %456 = vmatpush1.bf16.msra.mxu0 0
        %457 = vmatprep.subr.bf16.mxu0 0
        %458 = vmatpush1.bf16.msra.mxu0 0
        %459 = vmatprep.subr.bf16.mxu0 0
        %460 = vmatpush1.bf16.msra.mxu0 0
        %461 = vmatprep.mubr.bf16.mxu0 0
        %462 = vmatmul.mubr.bf16.gmra.mrb[0].mxu0 %v418
        %v463 = vpop.f32.mrb[0].mxu0
        %v464 = vadd.f32 %v382, %v463
        %v465 = vpop.f32.mrb[0].mxu0
        %v466 = vpop.f32.mrb[0].mxu0
        %v467 = vadd.f32 %v382, %v466
        %v468 = vpop.f32.mrb[0].mxu0
        %469 = vmatprep.mubr.bf16.mxu0 0
        %470 = vmatmul.mubr.bf16.gmra.mrb[0].mxu0 %v421
        %v471 = vpop.f32.mrb[0].mxu0
        %v472 = vadd.f32 %v382, %v471
        %v473 = vpop.f32.mrb[0].mxu0
        %v474 = vpop.f32.mrb[0].mxu0
        %v475 = vadd.f32 %v382, %v474
        %v476 = vpop.f32.mrb[0].mxu0
        %477 = vmatprep.mubr.bf16.mxu0 0
        %478 = vmatmul.mubr.bf16.gmra.mrb[0].mxu0 %v424
        %v479 = vpop.f32.mrb[0].mxu0
        %v480 = vadd.f32 %v382, %v479
        %v481 = vpop.f32.mrb[0].mxu0
        %v482 = vpop.f32.mrb[0].mxu0
        %v483 = vadd.f32 %v382, %v482
        %v484 = vpop.f32.mrb[0].mxu0
        %485 = vmatprep.mubr.bf16.mxu0 0
        %486 = vmatmul.mubr.bf16.gmra.mrb[0].mxu0 %v427
        %v487 = vpop.f32.mrb[0].mxu0
        %v488 = vadd.f32 %v382, %v487
        %v489 = vpop.f32.mrb[0].mxu0
        %v490 = vpop.f32.mrb[0].mxu0
        %v491 = vadd.f32 %v382, %v490
        %v492 = vpop.f32.mrb[0].mxu0
        %493 = vdwg.mxu0
        %v494 = vmul.f32 %v464, 0.5
        %v495 = vmul.f32 %v467, 0.5
        %v496 = vmul.f32 %v472, 0.5
        %v497 = vmul.f32 %v475, 0.5
        %v498 = vmul.f32 %v480, 0.5
        %v499 = vmul.f32 %v483, 0.5
        %v500 = vmul.f32 %v488, 0.5
        %v501 = vmul.f32 %v491, 0.5
        %v502 = vtanh.pop %v494
        %v503 = vtanh.pop %v495
        %v504 = vtanh.pop %v496
        %v505 = vtanh.pop %v497
        %v506 = vtanh.pop %v498
        %v507 = vtanh.pop %v499
        %v508 = vtanh.pop %v500
        %v509 = vtanh.pop %v501
        %v510 = vmul.f32 %v502, 0.5
        %v511 = vmul.f32 %v503, 0.5
        %v512 = vmul.f32 %v504, 0.5
        %v513 = vmul.f32 %v505, 0.5
        %v514 = vmul.f32 %v506, 0.5
        %v515 = vmul.f32 %v507, 0.5
        %v516 = vmul.f32 %v508, 0.5
        %v517 = vmul.f32 %v509, 0.5
        %v518 = vadd.f32 %v510, 0.5
        %v519 = vadd.f32 %v511, 0.5
        %v520 = vadd.f32 %v512, 0.5
        %v521 = vadd.f32 %v513, 0.5
        %v522 = vadd.f32 %v514, 0.5
        %v523 = vadd.f32 %v515, 0.5
        %v524 = vadd.f32 %v516, 0.5
        %v525 = vadd.f32 %v517, 0.5
        %v526 = vmul.f32 %v464, %v518
        %v527 = vmul.f32 %v467, %v519
        %v528 = vmul.f32 %v472, %v520
        %v529 = vmul.f32 %v475, %v521
        %v530 = vmul.f32 %v480, %v522
        %v531 = vmul.f32 %v483, %v523
        %v532 = vmul.f32 %v488, %v524
        %v533 = vmul.f32 %v491, %v525
        %v534 = vpack.c.bf16 %v527, %v526
        %v535 = vpack.c.bf16 %v529, %v528
        %v536 = vpack.c.bf16 %v531, %v530
        %v537 = vpack.c.bf16 %v533, %v532
        %v538 = vld [vmem:[#allocation3] sm:$0xff]
        %v539 = vld [vmem:[#allocation3 + $0x8] sm:$0xff]
        %v540 = vld [vmem:[#allocation3 + $0x10] sm:$0xff]
        %v541 = vld [vmem:[#allocation3 + $0x18] sm:$0xff]
        %v542 = vld [vmem:[#allocation3 + $0x20] sm:$0xff]
        %v543 = vld [vmem:[#allocation3 + $0x28] sm:$0xff]
        %v544 = vld [vmem:[#allocation3 + $0x30] sm:$0xff]
        %v545 = vld [vmem:[#allocation3 + $0x38] sm:$0xff]
        %v546 = vld [vmem:[#allocation3 + $0x40] sm:$0xff]
        %v547 = vld [vmem:[#allocation3 + $0x48] sm:$0xff]
        %v548 = vld [vmem:[#allocation3 + $0x50] sm:$0xff]
        %v549 = vld [vmem:[#allocation3 + $0x58] sm:$0xff]
        %v550 = vld [vmem:[#allocation3 + $0x60] sm:$0xff]
        %v551 = vld [vmem:[#allocation3 + $0x68] sm:$0xff]
        %v552 = vld [vmem:[#allocation3 + $0x70] sm:$0xff]
        %v553 = vld [vmem:[#allocation3 + $0x78] sm:$0xff]
        %v554 = vld [vmem:[#allocation3 + $0x80] sm:$0xff]
        %v555 = vld [vmem:[#allocation3 + $0x88] sm:$0xff]
        %v556 = vld [vmem:[#allocation3 + $0x90] sm:$0xff]
        %v557 = vld [vmem:[#allocation3 + $0x98] sm:$0xff]
        %v558 = vld [vmem:[%s338] sm:$0xff]
        %v559 = vld [vmem:[%s338 + $0x8] sm:$0x3]
        %v562 = vlaneseq
        %v563 = vshrl.u32 %v562, 7
        %v564 = vsub.s32 0, %v563
        %v565 = vrot.slane %v558, %v564
        %v566 = vlaneseq
        %v567 = vshrl.u32 %v566, 7
        %v568 = vsub.s32 1, %v567
        %v569 = vrot.slane %v558, %v568
        %v570 = vlaneseq
        %v571 = vshrl.u32 %v570, 7
        %v572 = vsub.s32 2, %v571
        %v573 = vrot.slane %v558, %v572
        %v574 = vlaneseq
        %v575 = vshrl.u32 %v574, 7
        %v576 = vsub.s32 3, %v575
        %v577 = vrot.slane %v558, %v576
        %v578 = vlaneseq
        %v579 = vshrl.u32 %v578, 7
        %v580 = vsub.s32 4, %v579
        %v581 = vrot.slane %v558, %v580
        %v582 = vlaneseq
        %v583 = vshrl.u32 %v582, 7
        %v584 = vsub.s32 5, %v583
        %v585 = vrot.slane %v558, %v584
        %v586 = vlaneseq
        %v587 = vshrl.u32 %v586, 7
        %v588 = vsub.s32 6, %v587
        %v589 = vrot.slane %v558, %v588
        %v590 = vlaneseq
        %v591 = vshrl.u32 %v590, 7
        %v592 = vsub.s32 7, %v591
        %v593 = vrot.slane %v558, %v592
        %v594 = vlaneseq
        %v595 = vshrl.u32 %v594, 7
        %v596 = vsub.s32 0, %v595
        %v597 = vrot.slane %v559, %v596
        %v598 = vlaneseq
        %v599 = vshrl.u32 %v598, 7
        %v600 = vsub.s32 1, %v599
        %v601 = vrot.slane %v559, %v600
        %v632 = vunpack.c.l.b16 %v538
        %v633 = vunpack.c.h.b16 %v538
        %v634 = vunpack.c.l.b16 %v539
        %v635 = vunpack.c.h.b16 %v539
        %v636 = vunpack.c.l.b16 %v540
        %v637 = vunpack.c.h.b16 %v540
        %v638 = vunpack.c.l.b16 %v541
        %v639 = vunpack.c.h.b16 %v541
        %v640 = vunpack.c.l.b16 %v542
        %v641 = vunpack.c.h.b16 %v542
        %v642 = vunpack.c.l.b16 %v543
        %v643 = vunpack.c.h.b16 %v543
        %v644 = vunpack.c.l.b16 %v544
        %v645 = vunpack.c.h.b16 %v544
        %v646 = vunpack.c.l.b16 %v545
        %v647 = vunpack.c.h.b16 %v545
        %v648 = vunpack.c.l.b16 %v546
        %v649 = vunpack.c.h.b16 %v546
        %v650 = vunpack.c.l.b16 %v547
        %v651 = vunpack.c.h.b16 %v547
        %v652 = vunpack.c.l.b16 %v548
        %v653 = vunpack.c.h.b16 %v548
        %v654 = vunpack.c.l.b16 %v549
        %v655 = vunpack.c.h.b16 %v549
        %v656 = vunpack.c.l.b16 %v550
        %v657 = vunpack.c.h.b16 %v550
        %v658 = vunpack.c.l.b16 %v551
        %v659 = vunpack.c.h.b16 %v551
        %v660 = vunpack.c.l.b16 %v552
        %v661 = vunpack.c.h.b16 %v552
        %v662 = vunpack.c.l.b16 %v553
        %v663 = vunpack.c.h.b16 %v553
        %v664 = vunpack.c.l.b16 %v554
        %v665 = vunpack.c.h.b16 %v554
        %v666 = vunpack.c.l.b16 %v555
        %v667 = vunpack.c.h.b16 %v555
        %v668 = vunpack.c.l.b16 %v556
        %v669 = vunpack.c.h.b16 %v556
        %v670 = vunpack.c.l.b16 %v557
        %v671 = vunpack.c.h.b16 %v557
        %v672 = vpack.c.b16 %v642, %v632
        %v673 = vpack.c.b16 %v643, %v633
        %v674 = vpack.c.b16 %v644, %v634
        %v675 = vpack.c.b16 %v645, %v635
        %v676 = vpack.c.b16 %v646, %v636
        %v677 = vpack.c.b16 %v647, %v637
        %v678 = vpack.c.b16 %v648, %v638
        %v679 = vpack.c.b16 %v649, %v639
        %v680 = vpack.c.b16 %v650, %v640
        %v681 = vpack.c.b16 %v651, %v641
        %v682 = vpack.c.b16 %v662, %v652
        %v683 = vpack.c.b16 %v663, %v653
        %v684 = vpack.c.b16 %v664, %v654
        %v685 = vpack.c.b16 %v665, %v655
        %v686 = vpack.c.b16 %v666, %v656
        %v687 = vpack.c.b16 %v667, %v657
        %v688 = vpack.c.b16 %v668, %v658
        %v689 = vpack.c.b16 %v669, %v659
        %v690 = vpack.c.b16 %v670, %v660
        %v691 = vpack.c.b16 %v671, %v661
        %v713 = vsel %vm416, %v534, 0
        %v716 = vsel %vm416, %v535, 0
        %v719 = vsel %vm416, %v536, 0
        %v722 = vsel %vm416, %v537, 0
        %724 = vmatprep.subr.bf16.mxu0 %v673
        %725 = vmatpush1.bf16.msra.mxu0 %v672
        %726 = vmatprep.subr.bf16.mxu0 %v683
        %727 = vmatpush1.bf16.msra.mxu0 %v682
        %728 = vmatprep.subr.bf16.mxu0 0
        %729 = vmatpush1.bf16.msra.mxu0 0
        %730 = vmatprep.subr.bf16.mxu0 0
        %731 = vmatpush1.bf16.msra.mxu0 0
        %732 = vmatprep.subr.bf16.mxu0 0
        %733 = vmatpush1.bf16.msra.mxu0 0
        %734 = vmatprep.subr.bf16.mxu0 0
        %735 = vmatpush1.bf16.msra.mxu0 0
        %736 = vmatprep.subr.bf16.mxu0 0
        %737 = vmatpush1.bf16.msra.mxu0 0
        %738 = vmatprep.subr.bf16.mxu0 0
        %739 = vmatpush1.bf16.msra.mxu0 0
        %740 = vmatprep.subr.bf16.mxu0 0
        %741 = vmatpush1.bf16.msra.mxu0 0
        %742 = vmatprep.subr.bf16.mxu0 0
        %743 = vmatpush1.bf16.msra.mxu0 0
        %744 = vmatprep.subr.bf16.mxu0 0
        %745 = vmatpush1.bf16.msra.mxu0 0
        %746 = vmatprep.subr.bf16.mxu0 0
        %747 = vmatpush1.bf16.msra.mxu0 0
        %748 = vmatprep.subr.bf16.mxu0 0
        %749 = vmatpush1.bf16.msra.mxu0 0
        %750 = vmatprep.subr.bf16.mxu0 0
        %751 = vmatpush1.bf16.msra.mxu0 0
        %752 = vmatprep.subr.bf16.mxu0 0
        %753 = vmatpush1.bf16.msra.mxu0 0
        %754 = vmatprep.subr.bf16.mxu0 0
        %755 = vmatpush1.bf16.msra.mxu0 0
        %756 = vmatprep.mubr.bf16.mxu0 0
        %757 = vmatmul.mubr.bf16.gmra.mrb[0].mxu0 %v713
        %v758 = vpop.f32.mrb[0].mxu0
        %v759 = vadd.f32 %v565, %v758
        %v760 = vpop.f32.mrb[0].mxu0
        %v761 = vadd.f32 %v569, %v760
        %v762 = vpop.f32.mrb[0].mxu0
        %v763 = vadd.f32 %v565, %v762
        %v764 = vpop.f32.mrb[0].mxu0
        %v765 = vadd.f32 %v569, %v764
        %766 = vmatprep.mubr.bf16.mxu0 0
        %767 = vmatmul.mubr.bf16.gmra.mrb[0].mxu0 %v716
        %v768 = vpop.f32.mrb[0].mxu0
        %v769 = vadd.f32 %v565, %v768
        %v770 = vpop.f32.mrb[0].mxu0
        %v771 = vadd.f32 %v569, %v770
        %v772 = vpop.f32.mrb[0].mxu0
        %v773 = vadd.f32 %v565, %v772
        %v774 = vpop.f32.mrb[0].mxu0
        %v775 = vadd.f32 %v569, %v774
        %776 = vmatprep.mubr.bf16.mxu0 0
        %777 = vmatmul.mubr.bf16.gmra.mrb[0].mxu0 %v719
        %v778 = vpop.f32.mrb[0].mxu0
        %v779 = vadd.f32 %v565, %v778
        %v780 = vpop.f32.mrb[0].mxu0
        %v781 = vadd.f32 %v569, %v780
        %v782 = vpop.f32.mrb[0].mxu0
        %v783 = vadd.f32 %v565, %v782
        %v784 = vpop.f32.mrb[0].mxu0
        %v785 = vadd.f32 %v569, %v784
        %786 = vmatprep.mubr.bf16.mxu0 0
        %787 = vmatmul.mubr.bf16.gmra.mrb[0].mxu0 %v722
        %v788 = vpop.f32.mrb[0].mxu0
        %v789 = vadd.f32 %v565, %v788
        %v790 = vpop.f32.mrb[0].mxu0
        %v791 = vadd.f32 %v569, %v790
        %v792 = vpop.f32.mrb[0].mxu0
        %v793 = vadd.f32 %v565, %v792
        %v794 = vpop.f32.mrb[0].mxu0
        %v795 = vadd.f32 %v569, %v794
        %796 = vdwg.mxu0
        %797 = vmatprep.subr.bf16.mxu0 %v675
        %798 = vmatpush1.bf16.msra.mxu0 %v674
        %799 = vmatprep.subr.bf16.mxu0 %v685
        %800 = vmatpush1.bf16.msra.mxu0 %v684
        %801 = vmatprep.subr.bf16.mxu0 0
        %802 = vmatpush1.bf16.msra.mxu0 0
        %803 = vmatprep.subr.bf16.mxu0 0
        %804 = vmatpush1.bf16.msra.mxu0 0
        %805 = vmatprep.subr.bf16.mxu0 0
        %806 = vmatpush1.bf16.msra.mxu0 0
        %807 = vmatprep.subr.bf16.mxu0 0
        %808 = vmatpush1.bf16.msra.mxu0 0
        %809 = vmatprep.subr.bf16.mxu0 0
        %810 = vmatpush1.bf16.msra.mxu0 0
        %811 = vmatprep.subr.bf16.mxu0 0
        %812 = vmatpush1.bf16.msra.mxu0 0
        %813 = vmatprep.subr.bf16.mxu0 0
        %814 = vmatpush1.bf16.msra.mxu0 0
        %815 = vmatprep.subr.bf16.mxu0 0
        %816 = vmatpush1.bf16.msra.mxu0 0
        %817 = vmatprep.subr.bf16.mxu0 0
        %818 = vmatpush1.bf16.msra.mxu0 0
        %819 = vmatprep.subr.bf16.mxu0 0
        %820 = vmatpush1.bf16.msra.mxu0 0
        %821 = vmatprep.subr.bf16.mxu0 0
        %822 = vmatpush1.bf16.msra.mxu0 0
        %823 = vmatprep.subr.bf16.mxu0 0
        %824 = vmatpush1.bf16.msra.mxu0 0
        %825 = vmatprep.subr.bf16.mxu0 0
        %826 = vmatpush1.bf16.msra.mxu0 0
        %827 = vmatprep.subr.bf16.mxu0 0
        %828 = vmatpush1.bf16.msra.mxu0 0
        %829 = vmatprep.mubr.bf16.mxu0 0
        %830 = vmatmul.mubr.bf16.gmra.mrb[0].mxu0 %v713
        %v831 = vpop.f32.mrb[0].mxu0
        %v832 = vadd.f32 %v573, %v831
        %v833 = vpop.f32.mrb[0].mxu0
        %v834 = vadd.f32 %v577, %v833
        %v835 = vpop.f32.mrb[0].mxu0
        %v836 = vadd.f32 %v573, %v835
        %v837 = vpop.f32.mrb[0].mxu0
        %v838 = vadd.f32 %v577, %v837
        %839 = vmatprep.mubr.bf16.mxu0 0
        %840 = vmatmul.mubr.bf16.gmra.mrb[0].mxu0 %v716
        %v841 = vpop.f32.mrb[0].mxu0
        %v842 = vadd.f32 %v573, %v841
        %v843 = vpop.f32.mrb[0].mxu0
        %v844 = vadd.f32 %v577, %v843
        %v845 = vpop.f32.mrb[0].mxu0
        %v846 = vadd.f32 %v573, %v845
        %v847 = vpop.f32.mrb[0].mxu0
        %v848 = vadd.f32 %v577, %v847
        %849 = vmatprep.mubr.bf16.mxu0 0
        %850 = vmatmul.mubr.bf16.gmra.mrb[0].mxu0 %v719
        %v851 = vpop.f32.mrb[0].mxu0
        %v852 = vadd.f32 %v573, %v851
        %v853 = vpop.f32.mrb[0].mxu0
        %v854 = vadd.f32 %v577, %v853
        %v855 = vpop.f32.mrb[0].mxu0
        %v856 = vadd.f32 %v573, %v855
        %v857 = vpop.f32.mrb[0].mxu0
        %v858 = vadd.f32 %v577, %v857
        %859 = vmatprep.mubr.bf16.mxu0 0
        %860 = vmatmul.mubr.bf16.gmra.mrb[0].mxu0 %v722
        %v861 = vpop.f32.mrb[0].mxu0
        %v862 = vadd.f32 %v573, %v861
        %v863 = vpop.f32.mrb[0].mxu0
        %v864 = vadd.f32 %v577, %v863
        %v865 = vpop.f32.mrb[0].mxu0
        %v866 = vadd.f32 %v573, %v865
        %v867 = vpop.f32.mrb[0].mxu0
        %v868 = vadd.f32 %v577, %v867
        %869 = vdwg.mxu0
        %870 = vmatprep.subr.bf16.mxu0 %v677
        %871 = vmatpush1.bf16.msra.mxu0 %v676
        %872 = vmatprep.subr.bf16.mxu0 %v687
        %873 = vmatpush1.bf16.msra.mxu0 %v686
        %874 = vmatprep.subr.bf16.mxu0 0
        %875 = vmatpush1.bf16.msra.mxu0 0
        %876 = vmatprep.subr.bf16.mxu0 0
        %877 = vmatpush1.bf16.msra.mxu0 0
        %878 = vmatprep.subr.bf16.mxu0 0
        %879 = vmatpush1.bf16.msra.mxu0 0
        %880 = vmatprep.subr.bf16.mxu0 0
        %881 = vmatpush1.bf16.msra.mxu0 0
        %882 = vmatprep.subr.bf16.mxu0 0
        %883 = vmatpush1.bf16.msra.mxu0 0
        %884 = vmatprep.subr.bf16.mxu0 0
        %885 = vmatpush1.bf16.msra.mxu0 0
        %886 = vmatprep.subr.bf16.mxu0 0
        %887 = vmatpush1.bf16.msra.mxu0 0
        %888 = vmatprep.subr.bf16.mxu0 0
        %889 = vmatpush1.bf16.msra.mxu0 0
        %890 = vmatprep.subr.bf16.mxu0 0
        %891 = vmatpush1.bf16.msra.mxu0 0
        %892 = vmatprep.subr.bf16.mxu0 0
        %893 = vmatpush1.bf16.msra.mxu0 0
        %894 = vmatprep.subr.bf16.mxu0 0
        %895 = vmatpush1.bf16.msra.mxu0 0
        %896 = vmatprep.subr.bf16.mxu0 0
        %897 = vmatpush1.bf16.msra.mxu0 0
        %898 = vmatprep.subr.bf16.mxu0 0
        %899 = vmatpush1.bf16.msra.mxu0 0
        %900 = vmatprep.subr.bf16.mxu0 0
        %901 = vmatpush1.bf16.msra.mxu0 0
        %902 = vmatprep.mubr.bf16.mxu0 0
        %903 = vmatmul.mubr.bf16.gmra.mrb[0].mxu0 %v713
        %v904 = vpop.f32.mrb[0].mxu0
        %v905 = vadd.f32 %v581, %v904
        %v906 = vpop.f32.mrb[0].mxu0
        %v907 = vadd.f32 %v585, %v906
        %v908 = vpop.f32.mrb[0].mxu0
        %v909 = vadd.f32 %v581, %v908
        %v910 = vpop.f32.mrb[0].mxu0
        %v911 = vadd.f32 %v585, %v910
        %912 = vmatprep.mubr.bf16.mxu0 0
        %913 = vmatmul.mubr.bf16.gmra.mrb[0].mxu0 %v716
        %v914 = vpop.f32.mrb[0].mxu0
        %v915 = vadd.f32 %v581, %v914
        %v916 = vpop.f32.mrb[0].mxu0
        %v917 = vadd.f32 %v585, %v916
        %v918 = vpop.f32.mrb[0].mxu0
        %v919 = vadd.f32 %v581, %v918
        %v920 = vpop.f32.mrb[0].mxu0
        %v921 = vadd.f32 %v585, %v920
        %922 = vmatprep.mubr.bf16.mxu0 0
        %923 = vmatmul.mubr.bf16.gmra.mrb[0].mxu0 %v719
        %v924 = vpop.f32.mrb[0].mxu0
        %v925 = vadd.f32 %v581, %v924
        %v926 = vpop.f32.mrb[0].mxu0
        %v927 = vadd.f32 %v585, %v926
        %v928 = vpop.f32.mrb[0].mxu0
        %v929 = vadd.f32 %v581, %v928
        %v930 = vpop.f32.mrb[0].mxu0
        %v931 = vadd.f32 %v585, %v930
        %932 = vmatprep.mubr.bf16.mxu0 0
        %933 = vmatmul.mubr.bf16.gmra.mrb[0].mxu0 %v722
        %v934 = vpop.f32.mrb[0].mxu0
        %v935 = vadd.f32 %v581, %v934
        %v936 = vpop.f32.mrb[0].mxu0
        %v937 = vadd.f32 %v585, %v936
        %v938 = vpop.f32.mrb[0].mxu0
        %v939 = vadd.f32 %v581, %v938
        %v940 = vpop.f32.mrb[0].mxu0
        %v941 = vadd.f32 %v585, %v940
        %942 = vdwg.mxu0
        %943 = vmatprep.subr.bf16.mxu0 %v679
        %944 = vmatpush1.bf16.msra.mxu0 %v678
        %945 = vmatprep.subr.bf16.mxu0 %v689
        %946 = vmatpush1.bf16.msra.mxu0 %v688
        %947 = vmatprep.subr.bf16.mxu0 0
        %948 = vmatpush1.bf16.msra.mxu0 0
        %949 = vmatprep.subr.bf16.mxu0 0
        %950 = vmatpush1.bf16.msra.mxu0 0
        %951 = vmatprep.subr.bf16.mxu0 0
        %952 = vmatpush1.bf16.msra.mxu0 0
        %953 = vmatprep.subr.bf16.mxu0 0
        %954 = vmatpush1.bf16.msra.mxu0 0
        %955 = vmatprep.subr.bf16.mxu0 0
        %956 = vmatpush1.bf16.msra.mxu0 0
        %957 = vmatprep.subr.bf16.mxu0 0
        %958 = vmatpush1.bf16.msra.mxu0 0
        %959 = vmatprep.subr.bf16.mxu0 0
        %960 = vmatpush1.bf16.msra.mxu0 0
        %961 = vmatprep.subr.bf16.mxu0 0
        %962 = vmatpush1.bf16.msra.mxu0 0
        %963 = vmatprep.subr.bf16.mxu0 0
        %964 = vmatpush1.bf16.msra.mxu0 0
        %965 = vmatprep.subr.bf16.mxu0 0
        %966 = vmatpush1.bf16.msra.mxu0 0
        %967 = vmatprep.subr.bf16.mxu0 0
        %968 = vmatpush1.bf16.msra.mxu0 0
        %969 = vmatprep.subr.bf16.mxu0 0
        %970 = vmatpush1.bf16.msra.mxu0 0
        %971 = vmatprep.subr.bf16.mxu0 0
        %972 = vmatpush1.bf16.msra.mxu0 0
        %973 = vmatprep.subr.bf16.mxu0 0
        %974 = vmatpush1.bf16.msra.mxu0 0
        %975 = vmatprep.mubr.bf16.mxu0 0
        %976 = vmatmul.mubr.bf16.gmra.mrb[0].mxu0 %v713
        %v977 = vpop.f32.mrb[0].mxu0
        %v978 = vadd.f32 %v589, %v977
        %v979 = vpop.f32.mrb[0].mxu0
        %v980 = vadd.f32 %v593, %v979
        %v981 = vpop.f32.mrb[0].mxu0
        %v982 = vadd.f32 %v589, %v981
        %v983 = vpop.f32.mrb[0].mxu0
        %v984 = vadd.f32 %v593, %v983
        %985 = vmatprep.mubr.bf16.mxu0 0
        %986 = vmatmul.mubr.bf16.gmra.mrb[0].mxu0 %v716
        %v987 = vpop.f32.mrb[0].mxu0
        %v988 = vadd.f32 %v589, %v987
        %v989 = vpop.f32.mrb[0].mxu0
        %v990 = vadd.f32 %v593, %v989
        %v991 = vpop.f32.mrb[0].mxu0
        %v992 = vadd.f32 %v589, %v991
        %v993 = vpop.f32.mrb[0].mxu0
        %v994 = vadd.f32 %v593, %v993
        %995 = vmatprep.mubr.bf16.mxu0 0
        %996 = vmatmul.mubr.bf16.gmra.mrb[0].mxu0 %v719
        %v997 = vpop.f32.mrb[0].mxu0
        %v998 = vadd.f32 %v589, %v997
        %v999 = vpop.f32.mrb[0].mxu0
        %v1000 = vadd.f32 %v593, %v999
        %v1001 = vpop.f32.mrb[0].mxu0
        %v1002 = vadd.f32 %v589, %v1001
        %v1003 = vpop.f32.mrb[0].mxu0
        %v1004 = vadd.f32 %v593, %v1003
        %1005 = vmatprep.mubr.bf16.mxu0 0
        %1006 = vmatmul.mubr.bf16.gmra.mrb[0].mxu0 %v722
        %v1007 = vpop.f32.mrb[0].mxu0
        %v1008 = vadd.f32 %v589, %v1007
        %v1009 = vpop.f32.mrb[0].mxu0
        %v1010 = vadd.f32 %v593, %v1009
        %v1011 = vpop.f32.mrb[0].mxu0
        %v1012 = vadd.f32 %v589, %v1011
        %v1013 = vpop.f32.mrb[0].mxu0
        %v1014 = vadd.f32 %v593, %v1013
        %1015 = vdwg.mxu0
        %1016 = vmatprep.subr.bf16.mxu0 %v681
        %1017 = vmatpush1.bf16.msra.mxu0 %v680
        %1018 = vmatprep.subr.bf16.mxu0 %v691
        %1019 = vmatpush1.bf16.msra.mxu0 %v690
        %1020 = vmatprep.subr.bf16.mxu0 0
        %1021 = vmatpush1.bf16.msra.mxu0 0
        %1022 = vmatprep.subr.bf16.mxu0 0
        %1023 = vmatpush1.bf16.msra.mxu0 0
        %1024 = vmatprep.subr.bf16.mxu0 0
        %1025 = vmatpush1.bf16.msra.mxu0 0
        %1026 = vmatprep.subr.bf16.mxu0 0
        %1027 = vmatpush1.bf16.msra.mxu0 0
        %1028 = vmatprep.subr.bf16.mxu0 0
        %1029 = vmatpush1.bf16.msra.mxu0 0
        %1030 = vmatprep.subr.bf16.mxu0 0
        %1031 = vmatpush1.bf16.msra.mxu0 0
        %1032 = vmatprep.subr.bf16.mxu0 0
        %1033 = vmatpush1.bf16.msra.mxu0 0
        %1034 = vmatprep.subr.bf16.mxu0 0
        %1035 = vmatpush1.bf16.msra.mxu0 0
        %1036 = vmatprep.subr.bf16.mxu0 0
        %1037 = vmatpush1.bf16.msra.mxu0 0
        %1038 = vmatprep.subr.bf16.mxu0 0
        %1039 = vmatpush1.bf16.msra.mxu0 0
        %1040 = vmatprep.subr.bf16.mxu0 0
        %1041 = vmatpush1.bf16.msra.mxu0 0
        %1042 = vmatprep.subr.bf16.mxu0 0
        %1043 = vmatpush1.bf16.msra.mxu0 0
        %1044 = vmatprep.subr.bf16.mxu0 0
        %1045 = vmatpush1.bf16.msra.mxu0 0
        %1046 = vmatprep.subr.bf16.mxu0 0
        %1047 = vmatpush1.bf16.msra.mxu0 0
        %1048 = vmatprep.mubr.bf16.mxu0 0
        %1049 = vmatmul.mubr.bf16.gmra.mrb[0].mxu0 %v713
        %v1050 = vpop.f32.mrb[0].mxu0
        %v1051 = vadd.f32 %v597, %v1050
        %v1052 = vpop.f32.mrb[0].mxu0
        %v1053 = vadd.f32 %v601, %v1052
        %v1054 = vpop.f32.mrb[0].mxu0
        %v1055 = vadd.f32 %v597, %v1054
        %v1056 = vpop.f32.mrb[0].mxu0
        %v1057 = vadd.f32 %v601, %v1056
        %1058 = vmatprep.mubr.bf16.mxu0 0
        %1059 = vmatmul.mubr.bf16.gmra.mrb[0].mxu0 %v716
        %v1060 = vpop.f32.mrb[0].mxu0
        %v1061 = vadd.f32 %v597, %v1060
        %v1062 = vpop.f32.mrb[0].mxu0
        %v1063 = vadd.f32 %v601, %v1062
        %v1064 = vpop.f32.mrb[0].mxu0
        %v1065 = vadd.f32 %v597, %v1064
        %v1066 = vpop.f32.mrb[0].mxu0
        %v1067 = vadd.f32 %v601, %v1066
        %1068 = vmatprep.mubr.bf16.mxu0 0
        %1069 = vmatmul.mubr.bf16.gmra.mrb[0].mxu0 %v719
        %v1070 = vpop.f32.mrb[0].mxu0
        %v1071 = vadd.f32 %v597, %v1070
        %v1072 = vpop.f32.mrb[0].mxu0
        %v1073 = vadd.f32 %v601, %v1072
        %v1074 = vpop.f32.mrb[0].mxu0
        %v1075 = vadd.f32 %v597, %v1074
        %v1076 = vpop.f32.mrb[0].mxu0
        %v1077 = vadd.f32 %v601, %v1076
        %1078 = vmatprep.mubr.bf16.mxu0 0
        %1079 = vmatmul.mubr.bf16.gmra.mrb[0].mxu0 %v722
        %v1080 = vpop.f32.mrb[0].mxu0
        %v1081 = vadd.f32 %v597, %v1080
        %v1082 = vpop.f32.mrb[0].mxu0
        %v1083 = vadd.f32 %v601, %v1082
        %v1084 = vpop.f32.mrb[0].mxu0
        %v1085 = vadd.f32 %v597, %v1084
        %v1086 = vpop.f32.mrb[0].mxu0
        %v1087 = vadd.f32 %v601, %v1086
        %1088 = vdwg.mxu0
        %v1089 = vmul.f32 %v759, 0.5
        %v1090 = vmul.f32 %v761, 0.5
        %v1091 = vmul.f32 %v832, 0.5
        %v1092 = vmul.f32 %v834, 0.5
        %v1093 = vmul.f32 %v905, 0.5
        %v1094 = vmul.f32 %v907, 0.5
        %v1095 = vmul.f32 %v978, 0.5
        %v1096 = vmul.f32 %v980, 0.5
        %v1097 = vmul.f32 %v1051, 0.5
        %v1098 = vmul.f32 %v1053, 0.5
        %v1099 = vmul.f32 %v763, 0.5
        %v1100 = vmul.f32 %v765, 0.5
        %v1101 = vmul.f32 %v836, 0.5
        %v1102 = vmul.f32 %v838, 0.5
        %v1103 = vmul.f32 %v909, 0.5
        %v1104 = vmul.f32 %v911, 0.5
        %v1105 = vmul.f32 %v982, 0.5
        %v1106 = vmul.f32 %v984, 0.5
        %v1107 = vmul.f32 %v1055, 0.5
        %v1108 = vmul.f32 %v1057, 0.5
        %v1109 = vmul.f32 %v769, 0.5
        %v1110 = vmul.f32 %v771, 0.5
        %v1111 = vmul.f32 %v842, 0.5
        %v1112 = vmul.f32 %v844, 0.5
        %v1113 = vmul.f32 %v915, 0.5
        %v1114 = vmul.f32 %v917, 0.5
        %v1115 = vmul.f32 %v988, 0.5
        %v1116 = vmul.f32 %v990, 0.5
        %v1117 = vmul.f32 %v1061, 0.5
        %v1118 = vmul.f32 %v1063, 0.5
        %v1119 = vmul.f32 %v773, 0.5
        %v1120 = vmul.f32 %v775, 0.5
        %v1121 = vmul.f32 %v846, 0.5
        %v1122 = vmul.f32 %v848, 0.5
        %v1123 = vmul.f32 %v919, 0.5
        %v1124 = vmul.f32 %v921, 0.5
        %v1125 = vmul.f32 %v992, 0.5
        %v1126 = vmul.f32 %v994, 0.5
        %v1127 = vmul.f32 %v1065, 0.5
        %v1128 = vmul.f32 %v1067, 0.5
        %v1129 = vmul.f32 %v779, 0.5
        %v1130 = vmul.f32 %v781, 0.5
        %v1131 = vmul.f32 %v852, 0.5
        %v1132 = vmul.f32 %v854, 0.5
        %v1133 = vmul.f32 %v925, 0.5
        %v1134 = vmul.f32 %v927, 0.5
        %v1135 = vmul.f32 %v998, 0.5
        %v1136 = vmul.f32 %v1000, 0.5
        %v1137 = vmul.f32 %v1071, 0.5
        %v1138 = vmul.f32 %v1073, 0.5
        %v1139 = vmul.f32 %v783, 0.5
        %v1140 = vmul.f32 %v785, 0.5
        %v1141 = vmul.f32 %v856, 0.5
        %v1142 = vmul.f32 %v858, 0.5
        %v1143 = vmul.f32 %v929, 0.5
        %v1144 = vmul.f32 %v931, 0.5
        %v1145 = vmul.f32 %v1002, 0.5
        %v1146 = vmul.f32 %v1004, 0.5
        %v1147 = vmul.f32 %v1075, 0.5
        %v1148 = vmul.f32 %v1077, 0.5
        %v1149 = vmul.f32 %v789, 0.5
        %v1150 = vmul.f32 %v791, 0.5
        %v1151 = vmul.f32 %v862, 0.5
        %v1152 = vmul.f32 %v864, 0.5
        %v1153 = vmul.f32 %v935, 0.5
        %v1154 = vmul.f32 %v937, 0.5
        %v1155 = vmul.f32 %v1008, 0.5
        %v1156 = vmul.f32 %v1010, 0.5
        %v1157 = vmul.f32 %v1081, 0.5
        %v1158 = vmul.f32 %v1083, 0.5
        %v1159 = vmul.f32 %v793, 0.5
        %v1160 = vmul.f32 %v795, 0.5
        %v1161 = vmul.f32 %v866, 0.5
        %v1162 = vmul.f32 %v868, 0.5
        %v1163 = vmul.f32 %v939, 0.5
        %v1164 = vmul.f32 %v941, 0.5
        %v1165 = vmul.f32 %v1012, 0.5
        %v1166 = vmul.f32 %v1014, 0.5
        %v1167 = vmul.f32 %v1085, 0.5
        %v1168 = vmul.f32 %v1087, 0.5
        %v1169 = vtanh.pop %v1089
        %v1170 = vtanh.pop %v1090
        %v1171 = vtanh.pop %v1091
        %v1172 = vtanh.pop %v1092
        %v1173 = vtanh.pop %v1093
        %v1174 = vtanh.pop %v1094
        %v1175 = vtanh.pop %v1095
        %v1176 = vtanh.pop %v1096
        %v1177 = vtanh.pop %v1097
        %v1178 = vtanh.pop %v1098
        %v1179 = vtanh.pop %v1099
        %v1180 = vtanh.pop %v1100
        %v1181 = vtanh.pop %v1101
        %v1182 = vtanh.pop %v1102
        %v1183 = vtanh.pop %v1103
        %v1184 = vtanh.pop %v1104
        %v1185 = vtanh.pop %v1105
        %v1186 = vtanh.pop %v1106
        %v1187 = vtanh.pop %v1107
        %v1188 = vtanh.pop %v1108
        %v1189 = vtanh.pop %v1109
        %v1190 = vtanh.pop %v1110
        %v1191 = vtanh.pop %v1111
        %v1192 = vtanh.pop %v1112
        %v1193 = vtanh.pop %v1113
        %v1194 = vtanh.pop %v1114
        %v1195 = vtanh.pop %v1115
        %v1196 = vtanh.pop %v1116
        %v1197 = vtanh.pop %v1117
        %v1198 = vtanh.pop %v1118
        %v1199 = vtanh.pop %v1119
        %v1200 = vtanh.pop %v1120
        %v1201 = vtanh.pop %v1121
        %v1202 = vtanh.pop %v1122
        %v1203 = vtanh.pop %v1123
        %v1204 = vtanh.pop %v1124
        %v1205 = vtanh.pop %v1125
        %v1206 = vtanh.pop %v1126
        %v1207 = vtanh.pop %v1127
        %v1208 = vtanh.pop %v1128
        %v1209 = vtanh.pop %v1129
        %v1210 = vtanh.pop %v1130
        %v1211 = vtanh.pop %v1131
        %v1212 = vtanh.pop %v1132
        %v1213 = vtanh.pop %v1133
        %v1214 = vtanh.pop %v1134
        %v1215 = vtanh.pop %v1135
        %v1216 = vtanh.pop %v1136
        %v1217 = vtanh.pop %v1137
        %v1218 = vtanh.pop %v1138
        %v1219 = vtanh.pop %v1139
        %v1220 = vtanh.pop %v1140
        %v1221 = vtanh.pop %v1141
        %v1222 = vtanh.pop %v1142
        %v1223 = vtanh.pop %v1143
        %v1224 = vtanh.pop %v1144
        %v1225 = vtanh.pop %v1145
        %v1226 = vtanh.pop %v1146
        %v1227 = vtanh.pop %v1147
        %v1228 = vtanh.pop %v1148
        %v1229 = vtanh.pop %v1149
        %v1230 = vtanh.pop %v1150
        %v1231 = vtanh.pop %v1151
        %v1232 = vtanh.pop %v1152
        %v1233 = vtanh.pop %v1153
        %v1234 = vtanh.pop %v1154
        %v1235 = vtanh.pop %v1155
        %v1236 = vtanh.pop %v1156
        %v1237 = vtanh.pop %v1157
        %v1238 = vtanh.pop %v1158
        %v1239 = vtanh.pop %v1159
        %v1240 = vtanh.pop %v1160
        %v1241 = vtanh.pop %v1161
        %v1242 = vtanh.pop %v1162
        %v1243 = vtanh.pop %v1163
        %v1244 = vtanh.pop %v1164
        %v1245 = vtanh.pop %v1165
        %v1246 = vtanh.pop %v1166
        %v1247 = vtanh.pop %v1167
        %v1248 = vtanh.pop %v1168
        %v1249 = vmul.f32 %v1169, 0.5
        %v1250 = vmul.f32 %v1170, 0.5
        %v1251 = vmul.f32 %v1171, 0.5
        %v1252 = vmul.f32 %v1172, 0.5
        %v1253 = vmul.f32 %v1173, 0.5
        %v1254 = vmul.f32 %v1174, 0.5
        %v1255 = vmul.f32 %v1175, 0.5
        %v1256 = vmul.f32 %v1176, 0.5
        %v1257 = vmul.f32 %v1177, 0.5
        %v1258 = vmul.f32 %v1178, 0.5
        %v1259 = vmul.f32 %v1179, 0.5
        %v1260 = vmul.f32 %v1180, 0.5
        %v1261 = vmul.f32 %v1181, 0.5
        %v1262 = vmul.f32 %v1182, 0.5
        %v1263 = vmul.f32 %v1183, 0.5
        %v1264 = vmul.f32 %v1184, 0.5
        %v1265 = vmul.f32 %v1185, 0.5
        %v1266 = vmul.f32 %v1186, 0.5
        %v1267 = vmul.f32 %v1187, 0.5
        %v1268 = vmul.f32 %v1188, 0.5
        %v1269 = vmul.f32 %v1189, 0.5
        %v1270 = vmul.f32 %v1190, 0.5
        %v1271 = vmul.f32 %v1191, 0.5
        %v1272 = vmul.f32 %v1192, 0.5
        %v1273 = vmul.f32 %v1193, 0.5
        %v1274 = vmul.f32 %v1194, 0.5
        %v1275 = vmul.f32 %v1195, 0.5
        %v1276 = vmul.f32 %v1196, 0.5
        %v1277 = vmul.f32 %v1197, 0.5
        %v1278 = vmul.f32 %v1198, 0.5
        %v1279 = vmul.f32 %v1199, 0.5
        %v1280 = vmul.f32 %v1200, 0.5
        %v1281 = vmul.f32 %v1201, 0.5
        %v1282 = vmul.f32 %v1202, 0.5
        %v1283 = vmul.f32 %v1203, 0.5
        %v1284 = vmul.f32 %v1204, 0.5
        %v1285 = vmul.f32 %v1205, 0.5
        %v1286 = vmul.f32 %v1206, 0.5
        %v1287 = vmul.f32 %v1207, 0.5
        %v1288 = vmul.f32 %v1208, 0.5
        %v1289 = vmul.f32 %v1209, 0.5
        %v1290 = vmul.f32 %v1210, 0.5
        %v1291 = vmul.f32 %v1211, 0.5
        %v1292 = vmul.f32 %v1212, 0.5
        %v1293 = vmul.f32 %v1213, 0.5
        %v1294 = vmul.f32 %v1214, 0.5
        %v1295 = vmul.f32 %v1215, 0.5
        %v1296 = vmul.f32 %v1216, 0.5
        %v1297 = vmul.f32 %v1217, 0.5
        %v1298 = vmul.f32 %v1218, 0.5
        %v1299 = vmul.f32 %v1219, 0.5
        %v1300 = vmul.f32 %v1220, 0.5
        %v1301 = vmul.f32 %v1221, 0.5
        %v1302 = vmul.f32 %v1222, 0.5
        %v1303 = vmul.f32 %v1223, 0.5
        %v1304 = vmul.f32 %v1224, 0.5
        %v1305 = vmul.f32 %v1225, 0.5
        %v1306 = vmul.f32 %v1226, 0.5
        %v1307 = vmul.f32 %v1227, 0.5
        %v1308 = vmul.f32 %v1228, 0.5
        %v1309 = vmul.f32 %v1229, 0.5
        %v1310 = vmul.f32 %v1230, 0.5
        %v1311 = vmul.f32 %v1231, 0.5
        %v1312 = vmul.f32 %v1232, 0.5
        %v1313 = vmul.f32 %v1233, 0.5
        %v1314 = vmul.f32 %v1234, 0.5
        %v1315 = vmul.f32 %v1235, 0.5
        %v1316 = vmul.f32 %v1236, 0.5
        %v1317 = vmul.f32 %v1237, 0.5
        %v1318 = vmul.f32 %v1238, 0.5
        %v1319 = vmul.f32 %v1239, 0.5
        %v1320 = vmul.f32 %v1240, 0.5
        %v1321 = vmul.f32 %v1241, 0.5
        %v1322 = vmul.f32 %v1242, 0.5
        %v1323 = vmul.f32 %v1243, 0.5
        %v1324 = vmul.f32 %v1244, 0.5
        %v1325 = vmul.f32 %v1245, 0.5
        %v1326 = vmul.f32 %v1246, 0.5
        %v1327 = vmul.f32 %v1247, 0.5
        %v1328 = vmul.f32 %v1248, 0.5
        %v1329 = vadd.f32 %v1249, 0.5
        %v1330 = vadd.f32 %v1250, 0.5
        %v1331 = vadd.f32 %v1251, 0.5
        %v1332 = vadd.f32 %v1252, 0.5
        %v1333 = vadd.f32 %v1253, 0.5
        %v1334 = vadd.f32 %v1254, 0.5
        %v1335 = vadd.f32 %v1255, 0.5
        %v1336 = vadd.f32 %v1256, 0.5
        %v1337 = vadd.f32 %v1257, 0.5
        %v1338 = vadd.f32 %v1258, 0.5
        %v1339 = vadd.f32 %v1259, 0.5
        %v1340 = vadd.f32 %v1260, 0.5
        %v1341 = vadd.f32 %v1261, 0.5
        %v1342 = vadd.f32 %v1262, 0.5
        %v1343 = vadd.f32 %v1263, 0.5
        %v1344 = vadd.f32 %v1264, 0.5
        %v1345 = vadd.f32 %v1265, 0.5
        %v1346 = vadd.f32 %v1266, 0.5
        %v1347 = vadd.f32 %v1267, 0.5
        %v1348 = vadd.f32 %v1268, 0.5
        %v1349 = vadd.f32 %v1269, 0.5
        %v1350 = vadd.f32 %v1270, 0.5
        %v1351 = vadd.f32 %v1271, 0.5
        %v1352 = vadd.f32 %v1272, 0.5
        %v1353 = vadd.f32 %v1273, 0.5
        %v1354 = vadd.f32 %v1274, 0.5
        %v1355 = vadd.f32 %v1275, 0.5
        %v1356 = vadd.f32 %v1276, 0.5
        %v1357 = vadd.f32 %v1277, 0.5
        %v1358 = vadd.f32 %v1278, 0.5
        %v1359 = vadd.f32 %v1279, 0.5
        %v1360 = vadd.f32 %v1280, 0.5
        %v1361 = vadd.f32 %v1281, 0.5
        %v1362 = vadd.f32 %v1282, 0.5
        %v1363 = vadd.f32 %v1283, 0.5
        %v1364 = vadd.f32 %v1284, 0.5
        %v1365 = vadd.f32 %v1285, 0.5
        %v1366 = vadd.f32 %v1286, 0.5
        %v1367 = vadd.f32 %v1287, 0.5
        %v1368 = vadd.f32 %v1288, 0.5
        %v1369 = vadd.f32 %v1289, 0.5
        %v1370 = vadd.f32 %v1290, 0.5
        %v1371 = vadd.f32 %v1291, 0.5
        %v1372 = vadd.f32 %v1292, 0.5
        %v1373 = vadd.f32 %v1293, 0.5
        %v1374 = vadd.f32 %v1294, 0.5
        %v1375 = vadd.f32 %v1295, 0.5
        %v1376 = vadd.f32 %v1296, 0.5
        %v1377 = vadd.f32 %v1297, 0.5
        %v1378 = vadd.f32 %v1298, 0.5
        %v1379 = vadd.f32 %v1299, 0.5
        %v1380 = vadd.f32 %v1300, 0.5
        %v1381 = vadd.f32 %v1301, 0.5
        %v1382 = vadd.f32 %v1302, 0.5
        %v1383 = vadd.f32 %v1303, 0.5
        %v1384 = vadd.f32 %v1304, 0.5
        %v1385 = vadd.f32 %v1305, 0.5
        %v1386 = vadd.f32 %v1306, 0.5
        %v1387 = vadd.f32 %v1307, 0.5
        %v1388 = vadd.f32 %v1308, 0.5
        %v1389 = vadd.f32 %v1309, 0.5
        %v1390 = vadd.f32 %v1310, 0.5
        %v1391 = vadd.f32 %v1311, 0.5
        %v1392 = vadd.f32 %v1312, 0.5
        %v1393 = vadd.f32 %v1313, 0.5
        %v1394 = vadd.f32 %v1314, 0.5
        %v1395 = vadd.f32 %v1315, 0.5
        %v1396 = vadd.f32 %v1316, 0.5
        %v1397 = vadd.f32 %v1317, 0.5
        %v1398 = vadd.f32 %v1318, 0.5
        %v1399 = vadd.f32 %v1319, 0.5
        %v1400 = vadd.f32 %v1320, 0.5
        %v1401 = vadd.f32 %v1321, 0.5
        %v1402 = vadd.f32 %v1322, 0.5
        %v1403 = vadd.f32 %v1323, 0.5
        %v1404 = vadd.f32 %v1324, 0.5
        %v1405 = vadd.f32 %v1325, 0.5
        %v1406 = vadd.f32 %v1326, 0.5
        %v1407 = vadd.f32 %v1327, 0.5
        %v1408 = vadd.f32 %v1328, 0.5
        %v1409 = vmul.f32 %v759, %v1329
        %v1410 = vmul.f32 %v761, %v1330
        %v1411 = vmul.f32 %v832, %v1331
        %v1412 = vmul.f32 %v834, %v1332
        %v1413 = vmul.f32 %v905, %v1333
        %v1414 = vmul.f32 %v907, %v1334
        %v1415 = vmul.f32 %v978, %v1335
        %v1416 = vmul.f32 %v980, %v1336
        %v1417 = vmul.f32 %v1051, %v1337
        %v1418 = vmul.f32 %v1053, %v1338
        %v1419 = vmul.f32 %v763, %v1339
        %v1420 = vmul.f32 %v765, %v1340
        %v1421 = vmul.f32 %v836, %v1341
        %v1422 = vmul.f32 %v838, %v1342
        %v1423 = vmul.f32 %v909, %v1343
        %v1424 = vmul.f32 %v911, %v1344
        %v1425 = vmul.f32 %v982, %v1345
        %v1426 = vmul.f32 %v984, %v1346
        %v1427 = vmul.f32 %v1055, %v1347
        %v1428 = vmul.f32 %v1057, %v1348
        %v1429 = vmul.f32 %v769, %v1349
        %v1430 = vmul.f32 %v771, %v1350
        %v1431 = vmul.f32 %v842, %v1351
        %v1432 = vmul.f32 %v844, %v1352
        %v1433 = vmul.f32 %v915, %v1353
        %v1434 = vmul.f32 %v917, %v1354
        %v1435 = vmul.f32 %v988, %v1355
        %v1436 = vmul.f32 %v990, %v1356
        %v1437 = vmul.f32 %v1061, %v1357
        %v1438 = vmul.f32 %v1063, %v1358
        %v1439 = vmul.f32 %v773, %v1359
        %v1440 = vmul.f32 %v775, %v1360
        %v1441 = vmul.f32 %v846, %v1361
        %v1442 = vmul.f32 %v848, %v1362
        %v1443 = vmul.f32 %v919, %v1363
        %v1444 = vmul.f32 %v921, %v1364
        %v1445 = vmul.f32 %v992, %v1365
        %v1446 = vmul.f32 %v994, %v1366
        %v1447 = vmul.f32 %v1065, %v1367
        %v1448 = vmul.f32 %v1067, %v1368
        %v1449 = vmul.f32 %v779, %v1369
        %v1450 = vmul.f32 %v781, %v1370
        %v1451 = vmul.f32 %v852, %v1371
        %v1452 = vmul.f32 %v854, %v1372
        %v1453 = vmul.f32 %v925, %v1373
        %v1454 = vmul.f32 %v927, %v1374
        %v1455 = vmul.f32 %v998, %v1375
        %v1456 = vmul.f32 %v1000, %v1376
        %v1457 = vmul.f32 %v1071, %v1377
        %v1458 = vmul.f32 %v1073, %v1378
        %v1459 = vmul.f32 %v783, %v1379
        %v1460 = vmul.f32 %v785, %v1380
        %v1461 = vmul.f32 %v856, %v1381
        %v1462 = vmul.f32 %v858, %v1382
        %v1463 = vmul.f32 %v929, %v1383
        %v1464 = vmul.f32 %v931, %v1384
        %v1465 = vmul.f32 %v1002, %v1385
        %v1466 = vmul.f32 %v1004, %v1386
        %v1467 = vmul.f32 %v1075, %v1387
        %v1468 = vmul.f32 %v1077, %v1388
        %v1469 = vmul.f32 %v789, %v1389
        %v1470 = vmul.f32 %v791, %v1390
        %v1471 = vmul.f32 %v862, %v1391
        %v1472 = vmul.f32 %v864, %v1392
        %v1473 = vmul.f32 %v935, %v1393
        %v1474 = vmul.f32 %v937, %v1394
        %v1475 = vmul.f32 %v1008, %v1395
        %v1476 = vmul.f32 %v1010, %v1396
        %v1477 = vmul.f32 %v1081, %v1397
        %v1478 = vmul.f32 %v1083, %v1398
        %v1479 = vmul.f32 %v793, %v1399
        %v1480 = vmul.f32 %v795, %v1400
        %v1481 = vmul.f32 %v866, %v1401
        %v1482 = vmul.f32 %v868, %v1402
        %v1483 = vmul.f32 %v939, %v1403
        %v1484 = vmul.f32 %v941, %v1404
        %v1485 = vmul.f32 %v1012, %v1405
        %v1486 = vmul.f32 %v1014, %v1406
        %v1487 = vmul.f32 %v1085, %v1407
        %v1488 = vmul.f32 %v1087, %v1408
        %v1489 = vld [vmem:[#allocation2] sm:$0xff]
        %v1490 = vld [vmem:[#allocation2 + $0x8] sm:$0xff]
        %v1491 = vld [vmem:[#allocation2 + $0x10] sm:$0xff]
        %v1492 = vld [vmem:[#allocation2 + $0x18] sm:$0xff]
        %v1493 = vld [vmem:[#allocation2 + $0x20] sm:$0xff]
        %v1494 = vld [vmem:[#allocation2 + $0x28] sm:$0xff]
        %v1495 = vld [vmem:[#allocation2 + $0x30] sm:$0xff]
        %v1496 = vld [vmem:[#allocation2 + $0x38] sm:$0xff]
        %v1497 = vld [vmem:[#allocation2 + $0x40] sm:$0xff]
        %v1498 = vld [vmem:[#allocation2 + $0x48] sm:$0xff]
        %v1499 = vadd.f32 %v1409, %v1419
        %v1500 = vadd.f32 %v1499, %v1429
        %v1501 = vadd.f32 %v1500, %v1439
        %v1502 = vadd.f32 %v1501, %v1449
        %v1503 = vadd.f32 %v1502, %v1459
        %v1504 = vadd.f32 %v1503, %v1469
        %v1505 = vadd.f32 %v1504, %v1479
        %v1506 = vadd.f32 %v1410, %v1420
        %v1507 = vadd.f32 %v1506, %v1430
        %v1508 = vadd.f32 %v1507, %v1440
        %v1509 = vadd.f32 %v1508, %v1450
        %v1510 = vadd.f32 %v1509, %v1460
        %v1511 = vadd.f32 %v1510, %v1470
        %v1512 = vadd.f32 %v1511, %v1480
        %v1513 = vadd.f32 %v1411, %v1421
        %v1514 = vadd.f32 %v1513, %v1431
        %v1515 = vadd.f32 %v1514, %v1441
        %v1516 = vadd.f32 %v1515, %v1451
        %v1517 = vadd.f32 %v1516, %v1461
        %v1518 = vadd.f32 %v1517, %v1471
        %v1519 = vadd.f32 %v1518, %v1481
        %v1520 = vadd.f32 %v1412, %v1422
        %v1521 = vadd.f32 %v1520, %v1432
        %v1522 = vadd.f32 %v1521, %v1442
        %v1523 = vadd.f32 %v1522, %v1452
        %v1524 = vadd.f32 %v1523, %v1462
        %v1525 = vadd.f32 %v1524, %v1472
        %v1526 = vadd.f32 %v1525, %v1482
        %v1527 = vadd.f32 %v1413, %v1423
        %v1528 = vadd.f32 %v1527, %v1433
        %v1529 = vadd.f32 %v1528, %v1443
        %v1530 = vadd.f32 %v1529, %v1453
        %v1531 = vadd.f32 %v1530, %v1463
        %v1532 = vadd.f32 %v1531, %v1473
        %v1533 = vadd.f32 %v1532, %v1483
        %v1534 = vadd.f32 %v1414, %v1424
        %v1535 = vadd.f32 %v1534, %v1434
        %v1536 = vadd.f32 %v1535, %v1444
        %v1537 = vadd.f32 %v1536, %v1454
        %v1538 = vadd.f32 %v1537, %v1464
        %v1539 = vadd.f32 %v1538, %v1474
        %v1540 = vadd.f32 %v1539, %v1484
        %v1541 = vadd.f32 %v1415, %v1425
        %v1542 = vadd.f32 %v1541, %v1435
        %v1543 = vadd.f32 %v1542, %v1445
        %v1544 = vadd.f32 %v1543, %v1455
        %v1545 = vadd.f32 %v1544, %v1465
        %v1546 = vadd.f32 %v1545, %v1475
        %v1547 = vadd.f32 %v1546, %v1485
        %v1548 = vadd.f32 %v1416, %v1426
        %v1549 = vadd.f32 %v1548, %v1436
        %v1550 = vadd.f32 %v1549, %v1446
        %v1551 = vadd.f32 %v1550, %v1456
        %v1552 = vadd.f32 %v1551, %v1466
        %v1553 = vadd.f32 %v1552, %v1476
        %v1554 = vadd.f32 %v1553, %v1486
        %v1555 = vadd.f32 %v1417, %v1427
        %v1556 = vadd.f32 %v1555, %v1437
        %v1557 = vadd.f32 %v1556, %v1447
        %v1558 = vadd.f32 %v1557, %v1457
        %v1559 = vadd.f32 %v1558, %v1467
        %v1560 = vadd.f32 %v1559, %v1477
        %v1561 = vadd.f32 %v1560, %v1487
        %v1562 = vadd.f32 %v1418, %v1428
        %v1563 = vadd.f32 %v1562, %v1438
        %v1564 = vadd.f32 %v1563, %v1448
        %v1565 = vadd.f32 %v1564, %v1458
        %v1566 = vadd.f32 %v1565, %v1468
        %v1567 = vadd.f32 %v1566, %v1478
        %v1568 = vadd.f32 %v1567, %v1488
        %v1569 = vadd.f32 %v1489, %v1505
        %v1570 = vadd.f32 %v1490, %v1512
        %v1571 = vadd.f32 %v1491, %v1519
        %v1572 = vadd.f32 %v1492, %v1526
        %v1573 = vadd.f32 %v1493, %v1533
        %v1574 = vadd.f32 %v1494, %v1540
        %v1575 = vadd.f32 %v1495, %v1547
        %v1576 = vadd.f32 %v1496, %v1554
        %v1577 = vadd.f32 %v1497, %v1561
        %v1578 = vadd.f32 %v1498, %v1568
        %1579 = vst [vmem:[#allocation2] sm:$0xff] %v1569
        %1580 = vst [vmem:[#allocation2 + $0x8] sm:$0xff] %v1570
        %1581 = vst [vmem:[#allocation2 + $0x10] sm:$0xff] %v1571
        %1582 = vst [vmem:[#allocation2 + $0x18] sm:$0xff] %v1572
        %1583 = vst [vmem:[#allocation2 + $0x20] sm:$0xff] %v1573
        %1584 = vst [vmem:[#allocation2 + $0x28] sm:$0xff] %v1574
        %1585 = vst [vmem:[#allocation2 + $0x30] sm:$0xff] %v1575
        %1586 = vst [vmem:[#allocation2 + $0x38] sm:$0xff] %v1576
        %1587 = vst [vmem:[#allocation2 + $0x40] sm:$0xff] %v1577
        %1588 = vst [vmem:[#allocation2 + $0x48] sm:$0xff] %v1578
        // Predicated region
        $region53: #{tpu_custom_call.1} parent=43 // pred_check
          %p1589 = pneg %p351
        $region54: #{tpu_custom_call.1} parent=43 // pred_check_branch
          %1591 = sbr.rel (%p1589) target = $region56
        $region55: #{tpu_custom_call.1} parent=43 // pred_region
          %v1592 = vld [vmem:[#allocation2] sm:$0xff]
          %v1593 = vld [vmem:[#allocation2 + $0x8] sm:$0xff]
          %v1594 = vld [vmem:[#allocation2 + $0x10] sm:$0xff]
          %v1595 = vld [vmem:[#allocation2 + $0x18] sm:$0xff]
          %v1596 = vld [vmem:[#allocation2 + $0x20] sm:$0xff]
          %v1597 = vld [vmem:[#allocation2 + $0x28] sm:$0xff]
          %v1598 = vld [vmem:[#allocation2 + $0x30] sm:$0xff]
          %v1599 = vld [vmem:[#allocation2 + $0x38] sm:$0xff]
          %v1600 = vld [vmem:[#allocation2 + $0x40] sm:$0xff]
          %v1601 = vld [vmem:[#allocation2 + $0x48] sm:$0xff]
          %v1602 = vrot.slane %v1592, 4
          %v1603 = vadd.f32 %v1592, %v1602
          %v1604 = vrot.slane %v1603, 2
          %v1605 = vadd.f32 %v1603, %v1604
          %v1606 = vrot.slane %v1605, 1
          %v1607 = vadd.f32 %v1605, %v1606
          %v1608 = vrot.slane %v1593, 4
          %v1609 = vadd.f32 %v1593, %v1608
          %v1610 = vrot.slane %v1609, 2
          %v1611 = vadd.f32 %v1609, %v1610
          %v1612 = vrot.slane %v1611, 1
          %v1613 = vadd.f32 %v1611, %v1612
          %v1614 = vrot.slane %v1594, 4
          %v1615 = vadd.f32 %v1594, %v1614
          %v1616 = vrot.slane %v1615, 2
          %v1617 = vadd.f32 %v1615, %v1616
          %v1618 = vrot.slane %v1617, 1
          %v1619 = vadd.f32 %v1617, %v1618
          %v1620 = vrot.slane %v1595, 4
          %v1621 = vadd.f32 %v1595, %v1620
          %v1622 = vrot.slane %v1621, 2
          %v1623 = vadd.f32 %v1621, %v1622
          %v1624 = vrot.slane %v1623, 1
          %v1625 = vadd.f32 %v1623, %v1624
          %v1626 = vrot.slane %v1596, 4
          %v1627 = vadd.f32 %v1596, %v1626
          %v1628 = vrot.slane %v1627, 2
          %v1629 = vadd.f32 %v1627, %v1628
          %v1630 = vrot.slane %v1629, 1
          %v1631 = vadd.f32 %v1629, %v1630
          %v1632 = vrot.slane %v1597, 4
          %v1633 = vadd.f32 %v1597, %v1632
          %v1634 = vrot.slane %v1633, 2
          %v1635 = vadd.f32 %v1633, %v1634
          %v1636 = vrot.slane %v1635, 1
          %v1637 = vadd.f32 %v1635, %v1636
          %v1638 = vrot.slane %v1598, 4
          %v1639 = vadd.f32 %v1598, %v1638
          %v1640 = vrot.slane %v1639, 2
          %v1641 = vadd.f32 %v1639, %v1640
          %v1642 = vrot.slane %v1641, 1
          %v1643 = vadd.f32 %v1641, %v1642
          %v1644 = vrot.slane %v1599, 4
          %v1645 = vadd.f32 %v1599, %v1644
          %v1646 = vrot.slane %v1645, 2
          %v1647 = vadd.f32 %v1645, %v1646
          %v1648 = vrot.slane %v1647, 1
          %v1649 = vadd.f32 %v1647, %v1648
          %v1650 = vrot.slane %v1600, 4
          %v1651 = vadd.f32 %v1600, %v1650
          %v1652 = vrot.slane %v1651, 2
          %v1653 = vadd.f32 %v1651, %v1652
          %v1654 = vrot.slane %v1653, 1
          %v1655 = vadd.f32 %v1653, %v1654
          %v1656 = vrot.slane %v1601, 4
          %v1657 = vadd.f32 %v1601, %v1656
          %v1658 = vrot.slane %v1657, 2
          %v1659 = vadd.f32 %v1657, %v1658
          %v1660 = vrot.slane %v1659, 1
          %v1661 = vadd.f32 %v1659, %v1660
          %v1662 = vmul.f32 %v1607, 0.015625
          %v1663 = vmul.f32 %v1613, 0.015625
          %v1664 = vmul.f32 %v1619, 0.015625
          %v1665 = vmul.f32 %v1625, 0.015625
          %v1666 = vmul.f32 %v1631, 0.015625
          %v1667 = vmul.f32 %v1637, 0.015625
          %v1668 = vmul.f32 %v1643, 0.015625
          %v1669 = vmul.f32 %v1649, 0.015625
          %v1670 = vmul.f32 %v1655, 0.015625
          %v1671 = vmul.f32 %v1661, 0.015625
          %v1672 = vld [vmem:[%s343] sm:$0xff]
          %v1673 = vld [vmem:[%s343 + $0x8] sm:$0x3]
          %v1676 = vlaneseq
          %v1677 = vshrl.u32 %v1676, 7
          %v1678 = vsub.s32 0, %v1677
          %v1679 = vrot.slane %v1672, %v1678
          %v1680 = vlaneseq
          %v1681 = vshrl.u32 %v1680, 7
          %v1682 = vsub.s32 1, %v1681
          %v1683 = vrot.slane %v1672, %v1682
          %v1684 = vlaneseq
          %v1685 = vshrl.u32 %v1684, 7
          %v1686 = vsub.s32 2, %v1685
          %v1687 = vrot.slane %v1672, %v1686
          %v1688 = vlaneseq
          %v1689 = vshrl.u32 %v1688, 7
          %v1690 = vsub.s32 3, %v1689
          %v1691 = vrot.slane %v1672, %v1690
          %v1692 = vlaneseq
          %v1693 = vshrl.u32 %v1692, 7
          %v1694 = vsub.s32 4, %v1693
          %v1695 = vrot.slane %v1672, %v1694
          %v1696 = vlaneseq
          %v1697 = vshrl.u32 %v1696, 7
          %v1698 = vsub.s32 5, %v1697
          %v1699 = vrot.slane %v1672, %v1698
          %v1700 = vlaneseq
          %v1701 = vshrl.u32 %v1700, 7
          %v1702 = vsub.s32 6, %v1701
          %v1703 = vrot.slane %v1672, %v1702
          %v1704 = vlaneseq
          %v1705 = vshrl.u32 %v1704, 7
          %v1706 = vsub.s32 7, %v1705
          %v1707 = vrot.slane %v1672, %v1706
          %v1708 = vlaneseq
          %v1709 = vshrl.u32 %v1708, 7
          %v1710 = vsub.s32 0, %v1709
          %v1711 = vrot.slane %v1673, %v1710
          %v1712 = vlaneseq
          %v1713 = vshrl.u32 %v1712, 7
          %v1714 = vsub.s32 1, %v1713
          %v1715 = vrot.slane %v1673, %v1714
          %v1726 = vmul.f32 %v1662, %v1679
          %v1727 = vmul.f32 %v1663, %v1683
          %v1728 = vmul.f32 %v1664, %v1687
          %v1729 = vmul.f32 %v1665, %v1691
          %v1730 = vmul.f32 %v1666, %v1695
          %v1731 = vmul.f32 %v1667, %v1699
          %v1732 = vmul.f32 %v1668, %v1703
          %v1733 = vmul.f32 %v1669, %v1707
          %v1734 = vmul.f32 %v1670, %v1711
          %v1735 = vmul.f32 %v1671, %v1715
          %vm1736 = vcmask 1040384
          %v1737 = vsel %vm1736, %v1726, 0.0
          %v1738 = vsel %vm1736, %v1727, 0.0
          %v1739 = vadd.f32 %v1737, %v1738
          %v1740 = vsel %vm1736, %v1728, 0.0
          %v1741 = vadd.f32 %v1739, %v1740
          %v1742 = vsel %vm1736, %v1729, 0.0
          %v1743 = vadd.f32 %v1741, %v1742
          %v1744 = vsel %vm1736, %v1730, 0.0
          %v1745 = vadd.f32 %v1743, %v1744
          %v1746 = vsel %vm1736, %v1731, 0.0
          %v1747 = vadd.f32 %v1745, %v1746
          %v1748 = vsel %vm1736, %v1732, 0.0
          %v1749 = vadd.f32 %v1747, %v1748
          %v1750 = vsel %vm1736, %v1733, 0.0
          %v1751 = vadd.f32 %v1749, %v1750
          %v1752 = vsel %vm1736, %v1734, 0.0
          %v1753 = vadd.f32 %v1751, %v1752
          %v1754 = vsel %vm1736, %v1735, 0.0
          %v1755 = vadd.f32 %v1753, %v1754
          %1756 = vadd.xlane.f32.xlu0 %v1755
          %v1757 = vpop.xlane.xlu0 %1756
          %vm1758 = vcmask 0
          %1759 = vst.msk [vmem:[%s348] sm:$0x1] %vm1758, %v1757
        $region56: #{tpu_custom_call.1} parent=43 // pred_fallthru
          _
        %s1760 = sadd.s32 %s23, %s24
        %p1761 = scmp.lt.s32.totalorder %s1760, 1
        %s1762 = scalar_select %p1761, %s1760, 1
        %s1763 = scalar_lea.vmem %s6, %s1762
        // Predicated region
        $region57: #{tpu_custom_call.1} parent=43 // pred_check
          %p1764 = pneg %p205
        $region58: #{tpu_custom_call.1} parent=43 // pred_check_branch
          %1766 = sbr.rel (%p1764) target = $region60
        $region59: #{tpu_custom_call.1} parent=43 // pred_region
          %s1767 = sadd.s32 %s23, %s24
        $region60: #{tpu_custom_call.1} parent=43 // pred_fallthru
          _
      $region44: #{tpu_custom_call.1} parent=5 // pred_fallthru
        _
      %p1768 = scmp.le.s32.totalorder 2, %s13
      // Predicated region
      $region61: #{tpu_custom_call.1} parent=5 // pred_check
        %p1769 = pneg %p1768
      $region62: #{tpu_custom_call.1} parent=5 // pred_check_branch
        %1771 = sbr.rel (%p1769) target = $region64
      $region63: #{tpu_custom_call.1} parent=5 // pred_region
        %s1772 = ssub.s32 %s13, 2
        // Predicated region
        $region65: #{tpu_custom_call.1} parent=63 // pred_check
          %p1773 = pneg %p211
        $region66: #{tpu_custom_call.1} parent=63 // pred_check_branch
          %1775 = sbr.rel (%p1773) target = $region68
        $region67: #{tpu_custom_call.1} parent=63 // pred_region
          %s1776 = sadd.s32 %s26, %s27
          %p1777 = scmp.lt.s32.totalorder %s1776, 1
          %s1778 = scalar_select %p1777, %s1776, 1
          %s1779 = scalar_lea.vmem %s6, %s1778
        $region68: #{tpu_custom_call.1} parent=63 // pred_fallthru
          _
      $region64: #{tpu_custom_call.1} parent=5 // pred_fallthru
        _
    $region6: #{tpu_custom_call.1} parent=1 // loop_footer
      %s17 = sadd.s32 1, %s13
    $region7: #{tpu_custom_call.1} parent=1 // loop_footer_branch
      %12 = sbr.rel target = $region3
    $region8: #{tpu_custom_call.1} parent=1 // loop_exit
      _
    %1780 = vsyncpa [#allocation4], 1
    %s1781 = scalar_lea.sflag [#allocation4], 1
    %1782 = vsyncpa %s1781, 1

</llo_original>
